<compile_context>
chip_gen: v6e
topology: v6e:2x2x1
jax: 0.10.0
libtpu: 0.0.40
codegen_flags: <defaults>
</compile_context>

<pallas_src>
import functools

import numpy as np
import jax
import jax.numpy as jnp
from jax.experimental import pallas as pl
from jax.experimental.pallas import tpu as pltpu


# ----------------------------- Pallas kernel ------------------------------ #
def bottleneck_kernel(H, W, Cmid,
                      x_ref, w1d_ref, b1d_ref, wr_ref, br_ref, ws_ref, bs_ref,
                      s2_ref, t2_ref, w3_ref, b3_ref, o_ref):
    # x_ref block: (bb, Cin, H*W)  (channels on sublanes, pixels on lanes)
    HW = H * W
    bb = x_ref.shape[0]

    # pixel coordinate iotas for the involution edge masks (static W)
    pix = jax.lax.broadcasted_iota(jnp.int32, (1, HW), 1)
    if (W & (W - 1)) == 0:             # power-of-two W: pure bit ops on the VPU
        py = pix >> (W.bit_length() - 1)
        px = pix & (W - 1)
    else:
        py = pix // W
        px = pix % W

    # parameters (weights are bf16, biases/scales f32) -- hoisted out of the batch loop
    w1d = w1d_ref[...]
    b1d = b1d_ref[...]
    wr = wr_ref[...]
    br = br_ref[...]
    ws = ws_ref[...]
    bs = bs_ref[...]
    s2 = s2_ref[...]
    t2 = t2_ref[...]
    w3 = w3_ref[...]
    b3 = b3_ref[...]

    offsets = [(dy - 1, dx - 1) for dy in range(3) for dx in range(3)]  # nn.Unfold order

    for b in range(bb):                                     # static unroll (bb is small)
        x = x_ref[b]                                        # (Cin, HW) f32
        xb = x.astype(jnp.bfloat16)

        # fused [conv1(1x1)+bn1 ; downsample conv(1x1)+bn] in a single MXU pass, then ReLU
        h = jnp.dot(w1d, xb, preferred_element_type=jnp.float32) + b1d
        h = jnp.maximum(h, 0.0)
        h1 = h[:Cmid]                                       # (Cmid, HW) main path
        res = h[Cmid:]                                      # (Cout, HW) residual (conv+bn+relu)

        # involution kernel generation: reduce(1x1+bn+relu) -> span(1x1)
        h1b = h1.astype(jnp.bfloat16)
        kr = jnp.maximum(
            jnp.dot(wr, h1b, preferred_element_type=jnp.float32) + br, 0.0)     # (red, HW)
        ker = jnp.dot(ws, kr.astype(jnp.bfloat16),
                      preferred_element_type=jnp.float32) + bs                  # (9, HW)

        # involution apply: 3x3 weighted neighborhood sum shared across channels (G=1).
        # In-register lane rolls (XLU) + edge masks -- no VMEM pad-scratch round trip.
        acc = h1 * ker[4:5, :]                              # center tap (oy=ox=0)
        for idx, (oy, ox) in enumerate(offsets):
            if oy == 0 and ox == 0:
                continue
            delta = oy * W + ox                             # flat pixel shift
            tap = pltpu.roll(h1, shift=(-delta) % HW, axis=1)
            valid = ((py + oy >= 0) & (py + oy < H) &
                     (px + ox >= 0) & (px + ox < W))        # (1, HW) bool, broadcast over Cmid
            tap = jnp.where(valid, tap, 0.0)
            acc = acc + tap * ker[idx:idx + 1, :]

        # bn2 (affine) + relu
        h2 = jnp.maximum(acc * s2 + t2, 0.0)

        # conv3 (1x1) + bn3 (folded)
        y = jnp.dot(w3, h2.astype(jnp.bfloat16), preferred_element_type=jnp.float32) + b3

        # out = relu(main + residual); (Cout, HW) store is lane-dense (HW on the lane dim)
        o_ref[b] = jnp.maximum(y + res, 0.0)


# ------------------------------- wrapper ----------------------------------- #
def bottleneck_forward(x_nchw, params, stride=1, batch_block=1):
    assert stride == 1  # TODO(synk): stride > 1 not supported in this kernel
    (w1d, b1d, wr, br, ws, bs, s2, t2, w3, b3) = params

    B, Cin, H, W = x_nchw.shape
    HW = H * W
    Cmid = s2.shape[0]
    Cout = w3.shape[0]
    red = wr.shape[0]

    bb = batch_block
    assert B % bb == 0, "batch must be divisible by batch_block"

    # NCHW with flattened spatial dims: channels->sublanes, pixels->lanes.
    # These reshapes are free (no boundary transposes).
    x = x_nchw.reshape(B, Cin, HW)

    param_list = [w1d, b1d, wr, br, ws, bs, s2, t2, w3, b3]
    in_specs = [pl.BlockSpec((bb, Cin, HW), lambda i: (i, 0, 0))]
    in_specs += [pl.BlockSpec(p.shape, lambda i: (0, 0)) for p in param_list]

    # advisory cost estimate for the XLA scheduler
    matmul_flops = 2 * B * HW * (Cin * (Cmid + Cout) + Cmid * red + red * 9 + Cmid * Cout)
    vpu_flops = B * HW * (18 * Cmid + 5 * Cmid + 3 * Cout)
    bytes_accessed = (B * Cin * HW * 4 + B * Cout * HW * 4 +
                      sum(int(np.prod(p.shape)) * p.dtype.itemsize for p in param_list))
    cost = pl.CostEstimate(flops=int(matmul_flops + vpu_flops), transcendentals=0,
                           bytes_accessed=int(bytes_accessed))

    kernel = functools.partial(bottleneck_kernel, H, W, Cmid)

    out = pl.pallas_call(
        kernel,
        out_shape=jax.ShapeDtypeStruct((B, Cout, HW), jnp.float32),
        grid_spec=pltpu.PrefetchScalarGridSpec(
            num_scalar_prefetch=0,
            grid=(B // bb,),
            in_specs=in_specs,
            out_specs=pl.BlockSpec((bb, Cout, HW), lambda i: (i, 0, 0)),
        ),
        compiler_params=pltpu.CompilerParams(dimension_semantics=("parallel",)),
        cost_estimate=cost,
    )(x, *param_list)

    return out.reshape(B, Cout, H, W)  # free reshape back to NCHW


# -------------------------- parameter construction ------------------------- #
def init_params(key, in_channels, out_channels):
    """Folded (inference-mode BN) params in kernel layout: weights (Cout_dim, Cin_dim) bf16,
    biases/scales as f32 columns. conv1 and downsample are concatenated into one weight."""
    mid = out_channels // 4
    red = max(mid // 4, 1)
    K = 3
    eps = 1e-5
    ks = jax.random.split(key, 14)

    def w(k, shape, scale=0.1):
        return scale * jax.random.normal(k, shape, jnp.float32)

    def bn(k, c):
        k1, k2, k3, k4 = jax.random.split(k, 4)
        gamma = 1.0 + 0.1 * jax.random.normal(k1, (c,), jnp.float32)
        beta = 0.1 * jax.random.normal(k2, (c,), jnp.float32)
        mean = 0.1 * jax.random.normal(k3, (c,), jnp.float32)
        var = 1.0 + 0.1 * jax.random.uniform(k4, (c,), jnp.float32)
        return gamma, beta, mean, var

    def fold_t(Wm, b, bnp):
        # Wm: (Cin_dim, Cout_dim) 1x1 conv weight -> transposed folded weight + bias column.
        gamma, beta, mean, var = bnp
        scale = gamma / jnp.sqrt(var + eps)
        Wt = (Wm * scale[None, :]).T                       # (Cout_dim, Cin_dim)
        bcol = ((b - mean) * scale + beta)[:, None]        # (Cout_dim, 1)
        return Wt, bcol

    # conv1 (Cin -> Cmid) + bn1
    A1t, c1 = fold_t(w(ks[0], (in_channels, mid)), w(ks[1], (mid,)), bn(ks[2], mid))
    # involution reduce conv (Cmid -> red) + bn
    Art, cr = fold_t(w(ks[3], (mid, red)), w(ks[4], (red,)), bn(ks[5], red))
    # involution span conv (red -> K*K), no bn
    Ast = w(ks[6], (red, K * K)).T                         # (9, red)
    cs = w(ks[7], (K * K,))[:, None]                       # (9, 1)
    # bn2 (affine only) applied on involution output
    g2, b2, m2, v2 = bn(ks[8], mid)
    sc2 = g2 / jnp.sqrt(v2 + eps)
    s2 = sc2[:, None]
    t2 = (b2 - m2 * sc2)[:, None]
    # conv3 (Cmid -> Cout) + bn3
    A3t, c3 = fold_t(w(ks[9], (mid, out_channels)), w(ks[10], (out_channels,)),
                     bn(ks[11], out_channels))
    # downsample conv (Cin -> Cout, bias=False) + bn (ReLU applied in kernel)
    Adt, cd = fold_t(w(ks[12], (in_channels, out_channels)),
                     jnp.zeros((out_channels,), jnp.float32), bn(ks[13], out_channels))

    # fuse conv1 + downsample (they share the same input x) into one matmul weight
    W1d = jnp.concatenate([A1t, Adt], axis=0).astype(jnp.bfloat16)   # (mid+Cout, Cin)
    b1d = jnp.concatenate([c1, cd], axis=0)                          # (mid+Cout, 1)

    return (W1d, b1d,
            Art.astype(jnp.bfloat16), cr,
            Ast.astype(jnp.bfloat16), cs,
            s2, t2,
            A3t.astype(jnp.bfloat16), c3)


# ----------------------------- pure-JAX reference -------------------------- #
def reference_forward(x_nchw, params):
    (w1d, b1d, wr, br, ws, bs, s2, t2, w3, b3) = params
    f32 = lambda a: a.astype(jnp.float32)
    B, Cin, H, W = x_nchw.shape
    Cmid = s2.shape[0]

    x = jnp.transpose(x_nchw, (0, 2, 3, 1)).reshape(B, H * W, Cin)
    a1 = f32(w1d[:Cmid]).T          # (Cin, Cmid)
    ad = f32(w1d[Cmid:]).T          # (Cin, Cout)
    c1 = b1d[:Cmid].T
    cd = b1d[Cmid:].T

    h1 = jax.nn.relu(x @ a1 + c1)                                   # (B, HW, Cmid)
    res = jax.nn.relu(x @ ad + cd)                                  # (B, HW, Cout)
    kr = jax.nn.relu(h1 @ f32(wr).T + br.T)                         # (B, HW, red)
    ker = (kr @ f32(ws).T + bs.T).reshape(B, H, W, 9)

    h1_hw = h1.reshape(B, H, W, Cmid)
    hp = jnp.pad(h1_hw, ((0, 0), (1, 1), (1, 1), (0, 0)))
    acc = jnp.zeros_like(h1_hw)
    idx = 0
    for dy in range(3):
        for dx in range(3):
            acc = acc + hp[:, dy:dy + H, dx:dx + W, :] * ker[..., idx:idx + 1]
            idx += 1

    h2 = jax.nn.relu(acc.reshape(B, H * W, Cmid) * s2.T + t2.T)
    y = h2 @ f32(w3).T + b3.T
    out = jax.nn.relu(y + res)
    return jnp.transpose(out.reshape(B, H, W, -1), (0, 3, 1, 2))


if __name__ == "__main__":
    key = jax.random.PRNGKey(0)
    kx, kp = jax.random.split(key)

    B, Cin, H, W = 2, 8, 16, 16
    Cout = 32  # mid_channels = 8, reduce channels = 2

    x_nchw = jax.random.normal(kx, (B, Cin, H, W), jnp.float32)
    params = init_params(kp, Cin, Cout)

    # batch_block=1 keeps a parallel batch grid axis (v7x: the 2 TensorCores split the batch);
    # on single-core v5e/v6e set batch_block=B to fold the batch into one grid step.
    out = bottleneck_forward(x_nchw, params, stride=1, batch_block=1)
    out = jax.block_until_ready(out)
    assert out.shape == (B, Cout, H, W), out.shape

    ref = reference_forward(x_nchw, params)
    out_np, ref_np = np.asarray(out), np.asarray(ref)
    if not np.allclose(out_np, ref_np, atol=2e-2, rtol=2e-2):  # bf16 MXU inputs, f32 accumulate
        raise AssertionError(
            f"Pallas kernel result does not match reference "
            f"(max abs err {np.max(np.abs(out_np - ref_np)):.3e})")

    print("KERNEL_OK")
</pallas_src>

<mosaic_0001>
module attributes {stable_mosaic.version = 11 : i64} {
  func.func @bottleneck_kernel(%arg0: i32, %arg1: memref<1x8x256xf32, #tpu.memory_space<vmem>>, %arg2: memref<40x8xbf16, #tpu.memory_space<vmem>>, %arg3: memref<40x1xf32, #tpu.memory_space<vmem>>, %arg4: memref<2x8xbf16, #tpu.memory_space<vmem>>, %arg5: memref<2x1xf32, #tpu.memory_space<vmem>>, %arg6: memref<9x2xbf16, #tpu.memory_space<vmem>>, %arg7: memref<9x1xf32, #tpu.memory_space<vmem>>, %arg8: memref<8x1xf32, #tpu.memory_space<vmem>>, %arg9: memref<8x1xf32, #tpu.memory_space<vmem>>, %arg10: memref<32x8xbf16, #tpu.memory_space<vmem>>, %arg11: memref<32x1xf32, #tpu.memory_space<vmem>>, %arg12: memref<1x32x256xf32, #tpu.memory_space<vmem>>) attributes {dimension_semantics = [#tpu.dimension_semantics<parallel>], iteration_bounds = array<i64: 2>, scalar_prefetch = 0 : i64, scratch_operands = 0 : i64, tpu.core_type = #tpu.core_type<tc>, window_params = [{transform_indices = @transform_0, window_bounds = array<i64: 1, 8, 256>}, {pipeline_mode = #tpu.pipeline_mode<synchronous>, transform_indices = @transform_1, window_bounds = array<i64: 40, 8>}, {pipeline_mode = #tpu.pipeline_mode<synchronous>, transform_indices = @transform_2, window_bounds = array<i64: 40, 1>}, {pipeline_mode = #tpu.pipeline_mode<synchronous>, transform_indices = @transform_3, window_bounds = array<i64: 2, 8>}, {pipeline_mode = #tpu.pipeline_mode<synchronous>, transform_indices = @transform_4, window_bounds = array<i64: 2, 1>}, {pipeline_mode = #tpu.pipeline_mode<synchronous>, transform_indices = @transform_5, window_bounds = array<i64: 9, 2>}, {pipeline_mode = #tpu.pipeline_mode<synchronous>, transform_indices = @transform_6, window_bounds = array<i64: 9, 1>}, {pipeline_mode = #tpu.pipeline_mode<synchronous>, transform_indices = @transform_7, window_bounds = array<i64: 8, 1>}, {pipeline_mode = #tpu.pipeline_mode<synchronous>, transform_indices = @transform_8, window_bounds = array<i64: 8, 1>}, {pipeline_mode = #tpu.pipeline_mode<synchronous>, transform_indices = @transform_9, window_bounds = array<i64: 32, 8>}, {pipeline_mode = #tpu.pipeline_mode<synchronous>, transform_indices = @transform_10, window_bounds = array<i64: 32, 1>}, {transform_indices = @transform_11, window_bounds = array<i64: 1, 32, 256>}]} {
    %0 = tpu.iota {dimensions = array<i32: 1>} : vector<1x256xi32>
    %c4_i32 = arith.constant 4 : i32
    %1 = vector.broadcast %c4_i32 : i32 to vector<1x256xi32>
    %2 = arith.shrsi %0, %1 : vector<1x256xi32>
    %c15_i32 = arith.constant 15 : i32
    %3 = vector.broadcast %c15_i32 : i32 to vector<1x256xi32>
    %4 = arith.andi %0, %3 : vector<1x256xi32>
    %c0 = arith.constant 0 : index
    %c0_0 = arith.constant 0 : index
    %5 = vector.load %arg2[%c0, %c0_0] : memref<40x8xbf16, #tpu.memory_space<vmem>>, vector<40x8xbf16>
    %c0_1 = arith.constant 0 : index
    %c0_2 = arith.constant 0 : index
    %6 = vector.load %arg3[%c0_1, %c0_2] : memref<40x1xf32, #tpu.memory_space<vmem>>, vector<40x1xf32>
    %c0_3 = arith.constant 0 : index
    %c0_4 = arith.constant 0 : index
    %7 = vector.load %arg4[%c0_3, %c0_4] : memref<2x8xbf16, #tpu.memory_space<vmem>>, vector<2x8xbf16>
    %c0_5 = arith.constant 0 : index
    %c0_6 = arith.constant 0 : index
    %8 = vector.load %arg5[%c0_5, %c0_6] : memref<2x1xf32, #tpu.memory_space<vmem>>, vector<2x1xf32>
    %c0_7 = arith.constant 0 : index
    %c0_8 = arith.constant 0 : index
    %9 = vector.load %arg6[%c0_7, %c0_8] : memref<9x2xbf16, #tpu.memory_space<vmem>>, vector<9x2xbf16>
    %c0_9 = arith.constant 0 : index
    %c0_10 = arith.constant 0 : index
    %10 = vector.load %arg7[%c0_9, %c0_10] : memref<9x1xf32, #tpu.memory_space<vmem>>, vector<9x1xf32>
    %c0_11 = arith.constant 0 : index
    %c0_12 = arith.constant 0 : index
    %11 = vector.load %arg8[%c0_11, %c0_12] : memref<8x1xf32, #tpu.memory_space<vmem>>, vector<8x1xf32>
    %c0_13 = arith.constant 0 : index
    %c0_14 = arith.constant 0 : index
    %12 = vector.load %arg9[%c0_13, %c0_14] : memref<8x1xf32, #tpu.memory_space<vmem>>, vector<8x1xf32>
    %c0_15 = arith.constant 0 : index
    %c0_16 = arith.constant 0 : index
    %13 = vector.load %arg10[%c0_15, %c0_16] : memref<32x8xbf16, #tpu.memory_space<vmem>>, vector<32x8xbf16>
    %c0_17 = arith.constant 0 : index
    %c0_18 = arith.constant 0 : index
    %14 = vector.load %arg11[%c0_17, %c0_18] : memref<32x1xf32, #tpu.memory_space<vmem>>, vector<32x1xf32>
    %c0_19 = arith.constant 0 : index
    %c0_20 = arith.constant 0 : index
    %c0_21 = arith.constant 0 : index
    %15 = vector.load %arg1[%c0_19, %c0_20, %c0_21] : memref<1x8x256xf32, #tpu.memory_space<vmem>>, vector<1x8x256xf32>
    %16 = vector.shape_cast %15 : vector<1x8x256xf32> to vector<8x256xf32>
    %17 = arith.truncf %16 : vector<8x256xf32> to vector<8x256xbf16>
    %cst = arith.constant dense<0.000000e+00> : vector<40x256xf32>
    %18 = tpu.matmul %5, %17, %cst {dimension_numbers = #tpu.dot_dimension_numbers<[1], [0], [0], [1], [0, 0, 1, 1], [], []>} : vector<40x8xbf16>, vector<8x256xbf16>, vector<40x256xf32> -> vector<40x256xf32>
    %19 = vector.broadcast %6 : vector<40x1xf32> to vector<40x256xf32>
    %20 = arith.addf %18, %19 : vector<40x256xf32>
    %cst_22 = arith.constant 0.000000e+00 : f32
    %21 = vector.broadcast %cst_22 : f32 to vector<40x256xf32>
    %22 = arith.maximumf %20, %21 : vector<40x256xf32>
    %23 = vector.extract_strided_slice %22 {offsets = [0, 0], sizes = [8, 256], strides = [1, 1]} : vector<40x256xf32> to vector<8x256xf32>
    %24 = vector.extract_strided_slice %22 {offsets = [8, 0], sizes = [32, 256], strides = [1, 1]} : vector<40x256xf32> to vector<32x256xf32>
    %25 = arith.truncf %23 : vector<8x256xf32> to vector<8x256xbf16>
    %cst_23 = arith.constant dense<0.000000e+00> : vector<2x256xf32>
    %26 = tpu.matmul %7, %25, %cst_23 {dimension_numbers = #tpu.dot_dimension_numbers<[1], [0], [0], [1], [0, 0, 1, 1], [], []>} : vector<2x8xbf16>, vector<8x256xbf16>, vector<2x256xf32> -> vector<2x256xf32>
    %27 = vector.broadcast %8 : vector<2x1xf32> to vector<2x256xf32>
    %28 = arith.addf %26, %27 : vector<2x256xf32>
    %cst_24 = arith.constant 0.000000e+00 : f32
    %29 = vector.broadcast %cst_24 : f32 to vector<2x256xf32>
    %30 = arith.maximumf %28, %29 : vector<2x256xf32>
    %31 = arith.truncf %30 : vector<2x256xf32> to vector<2x256xbf16>
    %cst_25 = arith.constant dense<0.000000e+00> : vector<9x256xf32>
    %32 = tpu.matmul %9, %31, %cst_25 {dimension_numbers = #tpu.dot_dimension_numbers<[1], [0], [0], [1], [0, 0, 1, 1], [], []>} : vector<9x2xbf16>, vector<2x256xbf16>, vector<9x256xf32> -> vector<9x256xf32>
    %33 = vector.broadcast %10 : vector<9x1xf32> to vector<9x256xf32>
    %34 = arith.addf %32, %33 : vector<9x256xf32>
    %35 = vector.extract_strided_slice %34 {offsets = [4, 0], sizes = [1, 256], strides = [1, 1]} : vector<9x256xf32> to vector<1x256xf32>
    %36 = vector.broadcast %35 : vector<1x256xf32> to vector<8x256xf32>
    %37 = arith.mulf %23, %36 : vector<8x256xf32>
    %c17_i32 = arith.constant 17 : i32
    %38 = tpu.dynamic_rotate %23 by %c17_i32 dim 1 : vector<8x256xf32>, i32 -> vector<8x256xf32>
    %c-1_i32 = arith.constant -1 : i32
    %39 = vector.broadcast %c-1_i32 : i32 to vector<1x256xi32>
    %40 = arith.addi %2, %39 : vector<1x256xi32>
    %c0_i32 = arith.constant 0 : i32
    %41 = vector.broadcast %c0_i32 : i32 to vector<1x256xi32>
    %42 = arith.cmpi sge, %40, %41 : vector<1x256xi32>
    %c-1_i32_26 = arith.constant -1 : i32
    %43 = vector.broadcast %c-1_i32_26 : i32 to vector<1x256xi32>
    %44 = arith.addi %2, %43 : vector<1x256xi32>
    %c16_i32 = arith.constant 16 : i32
    %45 = vector.broadcast %c16_i32 : i32 to vector<1x256xi32>
    %46 = arith.cmpi slt, %44, %45 : vector<1x256xi32>
    %47 = arith.andi %42, %46 : vector<1x256xi1>
    %c-1_i32_27 = arith.constant -1 : i32
    %48 = vector.broadcast %c-1_i32_27 : i32 to vector<1x256xi32>
    %49 = arith.addi %4, %48 : vector<1x256xi32>
    %c0_i32_28 = arith.constant 0 : i32
    %50 = vector.broadcast %c0_i32_28 : i32 to vector<1x256xi32>
    %51 = arith.cmpi sge, %49, %50 : vector<1x256xi32>
    %52 = arith.andi %47, %51 : vector<1x256xi1>
    %c-1_i32_29 = arith.constant -1 : i32
    %53 = vector.broadcast %c-1_i32_29 : i32 to vector<1x256xi32>
    %54 = arith.addi %4, %53 : vector<1x256xi32>
    %c16_i32_30 = arith.constant 16 : i32
    %55 = vector.broadcast %c16_i32_30 : i32 to vector<1x256xi32>
    %56 = arith.cmpi slt, %54, %55 : vector<1x256xi32>
    %57 = arith.andi %52, %56 : vector<1x256xi1>
    %cst_31 = arith.constant 0.000000e+00 : f32
    %58 = vector.shape_cast %57 : vector<1x256xi1> to vector<1x256xi1>
    %59 = vector.broadcast %58 : vector<1x256xi1> to vector<8x256xi1>
    %60 = vector.broadcast %cst_31 : f32 to vector<8x256xf32>
    %61 = arith.select %59, %38, %60 : vector<8x256xi1>, vector<8x256xf32>
    %62 = vector.extract_strided_slice %34 {offsets = [0, 0], sizes = [1, 256], strides = [1, 1]} : vector<9x256xf32> to vector<1x256xf32>
    %63 = vector.broadcast %62 : vector<1x256xf32> to vector<8x256xf32>
    %64 = arith.mulf %61, %63 : vector<8x256xf32>
    %65 = arith.addf %37, %64 : vector<8x256xf32>
    %c16_i32_32 = arith.constant 16 : i32
    %66 = tpu.dynamic_rotate %23 by %c16_i32_32 dim 1 : vector<8x256xf32>, i32 -> vector<8x256xf32>
    %c-1_i32_33 = arith.constant -1 : i32
    %67 = vector.broadcast %c-1_i32_33 : i32 to vector<1x256xi32>
    %68 = arith.addi %2, %67 : vector<1x256xi32>
    %c0_i32_34 = arith.constant 0 : i32
    %69 = vector.broadcast %c0_i32_34 : i32 to vector<1x256xi32>
    %70 = arith.cmpi sge, %68, %69 : vector<1x256xi32>
    %c-1_i32_35 = arith.constant -1 : i32
    %71 = vector.broadcast %c-1_i32_35 : i32 to vector<1x256xi32>
    %72 = arith.addi %2, %71 : vector<1x256xi32>
    %c16_i32_36 = arith.constant 16 : i32
    %73 = vector.broadcast %c16_i32_36 : i32 to vector<1x256xi32>
    %74 = arith.cmpi slt, %72, %73 : vector<1x256xi32>
    %75 = arith.andi %70, %74 : vector<1x256xi1>
    %c0_i32_37 = arith.constant 0 : i32
    %76 = vector.broadcast %c0_i32_37 : i32 to vector<1x256xi32>
    %77 = arith.addi %4, %76 : vector<1x256xi32>
    %c0_i32_38 = arith.constant 0 : i32
    %78 = vector.broadcast %c0_i32_38 : i32 to vector<1x256xi32>
    %79 = arith.cmpi sge, %77, %78 : vector<1x256xi32>
    %80 = arith.andi %75, %79 : vector<1x256xi1>
    %c0_i32_39 = arith.constant 0 : i32
    %81 = vector.broadcast %c0_i32_39 : i32 to vector<1x256xi32>
    %82 = arith.addi %4, %81 : vector<1x256xi32>
    %c16_i32_40 = arith.constant 16 : i32
    %83 = vector.broadcast %c16_i32_40 : i32 to vector<1x256xi32>
    %84 = arith.cmpi slt, %82, %83 : vector<1x256xi32>
    %85 = arith.andi %80, %84 : vector<1x256xi1>
    %cst_41 = arith.constant 0.000000e+00 : f32
    %86 = vector.shape_cast %85 : vector<1x256xi1> to vector<1x256xi1>
    %87 = vector.broadcast %86 : vector<1x256xi1> to vector<8x256xi1>
    %88 = vector.broadcast %cst_41 : f32 to vector<8x256xf32>
    %89 = arith.select %87, %66, %88 : vector<8x256xi1>, vector<8x256xf32>
    %90 = vector.extract_strided_slice %34 {offsets = [1, 0], sizes = [1, 256], strides = [1, 1]} : vector<9x256xf32> to vector<1x256xf32>
    %91 = vector.broadcast %90 : vector<1x256xf32> to vector<8x256xf32>
    %92 = arith.mulf %89, %91 : vector<8x256xf32>
    %93 = arith.addf %65, %92 : vector<8x256xf32>
    %c15_i32_42 = arith.constant 15 : i32
    %94 = tpu.dynamic_rotate %23 by %c15_i32_42 dim 1 : vector<8x256xf32>, i32 -> vector<8x256xf32>
    %c-1_i32_43 = arith.constant -1 : i32
    %95 = vector.broadcast %c-1_i32_43 : i32 to vector<1x256xi32>
    %96 = arith.addi %2, %95 : vector<1x256xi32>
    %c0_i32_44 = arith.constant 0 : i32
    %97 = vector.broadcast %c0_i32_44 : i32 to vector<1x256xi32>
    %98 = arith.cmpi sge, %96, %97 : vector<1x256xi32>
    %c-1_i32_45 = arith.constant -1 : i32
    %99 = vector.broadcast %c-1_i32_45 : i32 to vector<1x256xi32>
    %100 = arith.addi %2, %99 : vector<1x256xi32>
    %c16_i32_46 = arith.constant 16 : i32
    %101 = vector.broadcast %c16_i32_46 : i32 to vector<1x256xi32>
    %102 = arith.cmpi slt, %100, %101 : vector<1x256xi32>
    %103 = arith.andi %98, %102 : vector<1x256xi1>
    %c1_i32 = arith.constant 1 : i32
    %104 = vector.broadcast %c1_i32 : i32 to vector<1x256xi32>
    %105 = arith.addi %4, %104 : vector<1x256xi32>
    %c0_i32_47 = arith.constant 0 : i32
    %106 = vector.broadcast %c0_i32_47 : i32 to vector<1x256xi32>
    %107 = arith.cmpi sge, %105, %106 : vector<1x256xi32>
    %108 = arith.andi %103, %107 : vector<1x256xi1>
    %c1_i32_48 = arith.constant 1 : i32
    %109 = vector.broadcast %c1_i32_48 : i32 to vector<1x256xi32>
    %110 = arith.addi %4, %109 : vector<1x256xi32>
    %c16_i32_49 = arith.constant 16 : i32
    %111 = vector.broadcast %c16_i32_49 : i32 to vector<1x256xi32>
    %112 = arith.cmpi slt, %110, %111 : vector<1x256xi32>
    %113 = arith.andi %108, %112 : vector<1x256xi1>
    %cst_50 = arith.constant 0.000000e+00 : f32
    %114 = vector.shape_cast %113 : vector<1x256xi1> to vector<1x256xi1>
    %115 = vector.broadcast %114 : vector<1x256xi1> to vector<8x256xi1>
    %116 = vector.broadcast %cst_50 : f32 to vector<8x256xf32>
    %117 = arith.select %115, %94, %116 : vector<8x256xi1>, vector<8x256xf32>
    %118 = vector.extract_strided_slice %34 {offsets = [2, 0], sizes = [1, 256], strides = [1, 1]} : vector<9x256xf32> to vector<1x256xf32>
    %119 = vector.broadcast %118 : vector<1x256xf32> to vector<8x256xf32>
    %120 = arith.mulf %117, %119 : vector<8x256xf32>
    %121 = arith.addf %93, %120 : vector<8x256xf32>
    %c1_i32_51 = arith.constant 1 : i32
    %122 = tpu.dynamic_rotate %23 by %c1_i32_51 dim 1 : vector<8x256xf32>, i32 -> vector<8x256xf32>
    %c0_i32_52 = arith.constant 0 : i32
    %123 = vector.broadcast %c0_i32_52 : i32 to vector<1x256xi32>
    %124 = arith.addi %2, %123 : vector<1x256xi32>
    %c0_i32_53 = arith.constant 0 : i32
    %125 = vector.broadcast %c0_i32_53 : i32 to vector<1x256xi32>
    %126 = arith.cmpi sge, %124, %125 : vector<1x256xi32>
    %c0_i32_54 = arith.constant 0 : i32
    %127 = vector.broadcast %c0_i32_54 : i32 to vector<1x256xi32>
    %128 = arith.addi %2, %127 : vector<1x256xi32>
    %c16_i32_55 = arith.constant 16 : i32
    %129 = vector.broadcast %c16_i32_55 : i32 to vector<1x256xi32>
    %130 = arith.cmpi slt, %128, %129 : vector<1x256xi32>
    %131 = arith.andi %126, %130 : vector<1x256xi1>
    %c-1_i32_56 = arith.constant -1 : i32
    %132 = vector.broadcast %c-1_i32_56 : i32 to vector<1x256xi32>
    %133 = arith.addi %4, %132 : vector<1x256xi32>
    %c0_i32_57 = arith.constant 0 : i32
    %134 = vector.broadcast %c0_i32_57 : i32 to vector<1x256xi32>
    %135 = arith.cmpi sge, %133, %134 : vector<1x256xi32>
    %136 = arith.andi %131, %135 : vector<1x256xi1>
    %c-1_i32_58 = arith.constant -1 : i32
    %137 = vector.broadcast %c-1_i32_58 : i32 to vector<1x256xi32>
    %138 = arith.addi %4, %137 : vector<1x256xi32>
    %c16_i32_59 = arith.constant 16 : i32
    %139 = vector.broadcast %c16_i32_59 : i32 to vector<1x256xi32>
    %140 = arith.cmpi slt, %138, %139 : vector<1x256xi32>
    %141 = arith.andi %136, %140 : vector<1x256xi1>
    %cst_60 = arith.constant 0.000000e+00 : f32
    %142 = vector.shape_cast %141 : vector<1x256xi1> to vector<1x256xi1>
    %143 = vector.broadcast %142 : vector<1x256xi1> to vector<8x256xi1>
    %144 = vector.broadcast %cst_60 : f32 to vector<8x256xf32>
    %145 = arith.select %143, %122, %144 : vector<8x256xi1>, vector<8x256xf32>
    %146 = vector.extract_strided_slice %34 {offsets = [3, 0], sizes = [1, 256], strides = [1, 1]} : vector<9x256xf32> to vector<1x256xf32>
    %147 = vector.broadcast %146 : vector<1x256xf32> to vector<8x256xf32>
    %148 = arith.mulf %145, %147 : vector<8x256xf32>
    %149 = arith.addf %121, %148 : vector<8x256xf32>
    %c255_i32 = arith.constant 255 : i32
    %150 = tpu.dynamic_rotate %23 by %c255_i32 dim 1 : vector<8x256xf32>, i32 -> vector<8x256xf32>
    %c0_i32_61 = arith.constant 0 : i32
    %151 = vector.broadcast %c0_i32_61 : i32 to vector<1x256xi32>
    %152 = arith.addi %2, %151 : vector<1x256xi32>
    %c0_i32_62 = arith.constant 0 : i32
    %153 = vector.broadcast %c0_i32_62 : i32 to vector<1x256xi32>
    %154 = arith.cmpi sge, %152, %153 : vector<1x256xi32>
    %c0_i32_63 = arith.constant 0 : i32
    %155 = vector.broadcast %c0_i32_63 : i32 to vector<1x256xi32>
    %156 = arith.addi %2, %155 : vector<1x256xi32>
    %c16_i32_64 = arith.constant 16 : i32
    %157 = vector.broadcast %c16_i32_64 : i32 to vector<1x256xi32>
    %158 = arith.cmpi slt, %156, %157 : vector<1x256xi32>
    %159 = arith.andi %154, %158 : vector<1x256xi1>
    %c1_i32_65 = arith.constant 1 : i32
    %160 = vector.broadcast %c1_i32_65 : i32 to vector<1x256xi32>
    %161 = arith.addi %4, %160 : vector<1x256xi32>
    %c0_i32_66 = arith.constant 0 : i32
    %162 = vector.broadcast %c0_i32_66 : i32 to vector<1x256xi32>
    %163 = arith.cmpi sge, %161, %162 : vector<1x256xi32>
    %164 = arith.andi %159, %163 : vector<1x256xi1>
    %c1_i32_67 = arith.constant 1 : i32
    %165 = vector.broadcast %c1_i32_67 : i32 to vector<1x256xi32>
    %166 = arith.addi %4, %165 : vector<1x256xi32>
    %c16_i32_68 = arith.constant 16 : i32
    %167 = vector.broadcast %c16_i32_68 : i32 to vector<1x256xi32>
    %168 = arith.cmpi slt, %166, %167 : vector<1x256xi32>
    %169 = arith.andi %164, %168 : vector<1x256xi1>
    %cst_69 = arith.constant 0.000000e+00 : f32
    %170 = vector.shape_cast %169 : vector<1x256xi1> to vector<1x256xi1>
    %171 = vector.broadcast %170 : vector<1x256xi1> to vector<8x256xi1>
    %172 = vector.broadcast %cst_69 : f32 to vector<8x256xf32>
    %173 = arith.select %171, %150, %172 : vector<8x256xi1>, vector<8x256xf32>
    %174 = vector.extract_strided_slice %34 {offsets = [5, 0], sizes = [1, 256], strides = [1, 1]} : vector<9x256xf32> to vector<1x256xf32>
    %175 = vector.broadcast %174 : vector<1x256xf32> to vector<8x256xf32>
    %176 = arith.mulf %173, %175 : vector<8x256xf32>
    %177 = arith.addf %149, %176 : vector<8x256xf32>
    %c241_i32 = arith.constant 241 : i32
    %178 = tpu.dynamic_rotate %23 by %c241_i32 dim 1 : vector<8x256xf32>, i32 -> vector<8x256xf32>
    %c1_i32_70 = arith.constant 1 : i32
    %179 = vector.broadcast %c1_i32_70 : i32 to vector<1x256xi32>
    %180 = arith.addi %2, %179 : vector<1x256xi32>
    %c0_i32_71 = arith.constant 0 : i32
    %181 = vector.broadcast %c0_i32_71 : i32 to vector<1x256xi32>
    %182 = arith.cmpi sge, %180, %181 : vector<1x256xi32>
    %c1_i32_72 = arith.constant 1 : i32
    %183 = vector.broadcast %c1_i32_72 : i32 to vector<1x256xi32>
    %184 = arith.addi %2, %183 : vector<1x256xi32>
    %c16_i32_73 = arith.constant 16 : i32
    %185 = vector.broadcast %c16_i32_73 : i32 to vector<1x256xi32>
    %186 = arith.cmpi slt, %184, %185 : vector<1x256xi32>
    %187 = arith.andi %182, %186 : vector<1x256xi1>
    %c-1_i32_74 = arith.constant -1 : i32
    %188 = vector.broadcast %c-1_i32_74 : i32 to vector<1x256xi32>
    %189 = arith.addi %4, %188 : vector<1x256xi32>
    %c0_i32_75 = arith.constant 0 : i32
    %190 = vector.broadcast %c0_i32_75 : i32 to vector<1x256xi32>
    %191 = arith.cmpi sge, %189, %190 : vector<1x256xi32>
    %192 = arith.andi %187, %191 : vector<1x256xi1>
    %c-1_i32_76 = arith.constant -1 : i32
    %193 = vector.broadcast %c-1_i32_76 : i32 to vector<1x256xi32>
    %194 = arith.addi %4, %193 : vector<1x256xi32>
    %c16_i32_77 = arith.constant 16 : i32
    %195 = vector.broadcast %c16_i32_77 : i32 to vector<1x256xi32>
    %196 = arith.cmpi slt, %194, %195 : vector<1x256xi32>
    %197 = arith.andi %192, %196 : vector<1x256xi1>
    %cst_78 = arith.constant 0.000000e+00 : f32
    %198 = vector.shape_cast %197 : vector<1x256xi1> to vector<1x256xi1>
    %199 = vector.broadcast %198 : vector<1x256xi1> to vector<8x256xi1>
    %200 = vector.broadcast %cst_78 : f32 to vector<8x256xf32>
    %201 = arith.select %199, %178, %200 : vector<8x256xi1>, vector<8x256xf32>
    %202 = vector.extract_strided_slice %34 {offsets = [6, 0], sizes = [1, 256], strides = [1, 1]} : vector<9x256xf32> to vector<1x256xf32>
    %203 = vector.broadcast %202 : vector<1x256xf32> to vector<8x256xf32>
    %204 = arith.mulf %201, %203 : vector<8x256xf32>
    %205 = arith.addf %177, %204 : vector<8x256xf32>
    %c240_i32 = arith.constant 240 : i32
    %206 = tpu.dynamic_rotate %23 by %c240_i32 dim 1 : vector<8x256xf32>, i32 -> vector<8x256xf32>
    %c1_i32_79 = arith.constant 1 : i32
    %207 = vector.broadcast %c1_i32_79 : i32 to vector<1x256xi32>
    %208 = arith.addi %2, %207 : vector<1x256xi32>
    %c0_i32_80 = arith.constant 0 : i32
    %209 = vector.broadcast %c0_i32_80 : i32 to vector<1x256xi32>
    %210 = arith.cmpi sge, %208, %209 : vector<1x256xi32>
    %c1_i32_81 = arith.constant 1 : i32
    %211 = vector.broadcast %c1_i32_81 : i32 to vector<1x256xi32>
    %212 = arith.addi %2, %211 : vector<1x256xi32>
    %c16_i32_82 = arith.constant 16 : i32
    %213 = vector.broadcast %c16_i32_82 : i32 to vector<1x256xi32>
    %214 = arith.cmpi slt, %212, %213 : vector<1x256xi32>
    %215 = arith.andi %210, %214 : vector<1x256xi1>
    %c0_i32_83 = arith.constant 0 : i32
    %216 = vector.broadcast %c0_i32_83 : i32 to vector<1x256xi32>
    %217 = arith.addi %4, %216 : vector<1x256xi32>
    %c0_i32_84 = arith.constant 0 : i32
    %218 = vector.broadcast %c0_i32_84 : i32 to vector<1x256xi32>
    %219 = arith.cmpi sge, %217, %218 : vector<1x256xi32>
    %220 = arith.andi %215, %219 : vector<1x256xi1>
    %c0_i32_85 = arith.constant 0 : i32
    %221 = vector.broadcast %c0_i32_85 : i32 to vector<1x256xi32>
    %222 = arith.addi %4, %221 : vector<1x256xi32>
    %c16_i32_86 = arith.constant 16 : i32
    %223 = vector.broadcast %c16_i32_86 : i32 to vector<1x256xi32>
    %224 = arith.cmpi slt, %222, %223 : vector<1x256xi32>
    %225 = arith.andi %220, %224 : vector<1x256xi1>
    %cst_87 = arith.constant 0.000000e+00 : f32
    %226 = vector.shape_cast %225 : vector<1x256xi1> to vector<1x256xi1>
    %227 = vector.broadcast %226 : vector<1x256xi1> to vector<8x256xi1>
    %228 = vector.broadcast %cst_87 : f32 to vector<8x256xf32>
    %229 = arith.select %227, %206, %228 : vector<8x256xi1>, vector<8x256xf32>
    %230 = vector.extract_strided_slice %34 {offsets = [7, 0], sizes = [1, 256], strides = [1, 1]} : vector<9x256xf32> to vector<1x256xf32>
    %231 = vector.broadcast %230 : vector<1x256xf32> to vector<8x256xf32>
    %232 = arith.mulf %229, %231 : vector<8x256xf32>
    %233 = arith.addf %205, %232 : vector<8x256xf32>
    %c239_i32 = arith.constant 239 : i32
    %234 = tpu.dynamic_rotate %23 by %c239_i32 dim 1 : vector<8x256xf32>, i32 -> vector<8x256xf32>
    %c1_i32_88 = arith.constant 1 : i32
    %235 = vector.broadcast %c1_i32_88 : i32 to vector<1x256xi32>
    %236 = arith.addi %2, %235 : vector<1x256xi32>
    %c0_i32_89 = arith.constant 0 : i32
    %237 = vector.broadcast %c0_i32_89 : i32 to vector<1x256xi32>
    %238 = arith.cmpi sge, %236, %237 : vector<1x256xi32>
    %c1_i32_90 = arith.constant 1 : i32
    %239 = vector.broadcast %c1_i32_90 : i32 to vector<1x256xi32>
    %240 = arith.addi %2, %239 : vector<1x256xi32>
    %c16_i32_91 = arith.constant 16 : i32
    %241 = vector.broadcast %c16_i32_91 : i32 to vector<1x256xi32>
    %242 = arith.cmpi slt, %240, %241 : vector<1x256xi32>
    %243 = arith.andi %238, %242 : vector<1x256xi1>
    %c1_i32_92 = arith.constant 1 : i32
    %244 = vector.broadcast %c1_i32_92 : i32 to vector<1x256xi32>
    %245 = arith.addi %4, %244 : vector<1x256xi32>
    %c0_i32_93 = arith.constant 0 : i32
    %246 = vector.broadcast %c0_i32_93 : i32 to vector<1x256xi32>
    %247 = arith.cmpi sge, %245, %246 : vector<1x256xi32>
    %248 = arith.andi %243, %247 : vector<1x256xi1>
    %c1_i32_94 = arith.constant 1 : i32
    %249 = vector.broadcast %c1_i32_94 : i32 to vector<1x256xi32>
    %250 = arith.addi %4, %249 : vector<1x256xi32>
    %c16_i32_95 = arith.constant 16 : i32
    %251 = vector.broadcast %c16_i32_95 : i32 to vector<1x256xi32>
    %252 = arith.cmpi slt, %250, %251 : vector<1x256xi32>
    %253 = arith.andi %248, %252 : vector<1x256xi1>
    %cst_96 = arith.constant 0.000000e+00 : f32
    %254 = vector.shape_cast %253 : vector<1x256xi1> to vector<1x256xi1>
    %255 = vector.broadcast %254 : vector<1x256xi1> to vector<8x256xi1>
    %256 = vector.broadcast %cst_96 : f32 to vector<8x256xf32>
    %257 = arith.select %255, %234, %256 : vector<8x256xi1>, vector<8x256xf32>
    %258 = vector.extract_strided_slice %34 {offsets = [8, 0], sizes = [1, 256], strides = [1, 1]} : vector<9x256xf32> to vector<1x256xf32>
    %259 = vector.broadcast %258 : vector<1x256xf32> to vector<8x256xf32>
    %260 = arith.mulf %257, %259 : vector<8x256xf32>
    %261 = arith.addf %233, %260 : vector<8x256xf32>
    %262 = vector.broadcast %11 : vector<8x1xf32> to vector<8x256xf32>
    %263 = arith.mulf %261, %262 : vector<8x256xf32>
    %264 = vector.broadcast %12 : vector<8x1xf32> to vector<8x256xf32>
    %265 = arith.addf %263, %264 : vector<8x256xf32>
    %cst_97 = arith.constant 0.000000e+00 : f32
    %266 = vector.broadcast %cst_97 : f32 to vector<8x256xf32>
    %267 = arith.maximumf %265, %266 : vector<8x256xf32>
    %268 = arith.truncf %267 : vector<8x256xf32> to vector<8x256xbf16>
    %cst_98 = arith.constant dense<0.000000e+00> : vector<32x256xf32>
    %269 = tpu.matmul %13, %268, %cst_98 {dimension_numbers = #tpu.dot_dimension_numbers<[1], [0], [0], [1], [0, 0, 1, 1], [], []>} : vector<32x8xbf16>, vector<8x256xbf16>, vector<32x256xf32> -> vector<32x256xf32>
    %270 = vector.broadcast %14 : vector<32x1xf32> to vector<32x256xf32>
    %271 = arith.addf %269, %270 : vector<32x256xf32>
    %272 = arith.addf %271, %24 : vector<32x256xf32>
    %cst_99 = arith.constant 0.000000e+00 : f32
    %273 = vector.broadcast %cst_99 : f32 to vector<32x256xf32>
    %274 = arith.maximumf %272, %273 : vector<32x256xf32>
    %c0_100 = arith.constant 0 : index
    %c0_101 = arith.constant 0 : index
    %c0_102 = arith.constant 0 : index
    %275 = vector.load %arg12[%c0_100, %c0_101, %c0_102] : memref<1x32x256xf32, #tpu.memory_space<vmem>>, vector<1x32x256xf32>
    %276 = vector.shape_cast %275 : vector<1x32x256xf32> to vector<32x256xf32>
    %277 = vector.shape_cast %274 : vector<32x256xf32> to vector<1x32x256xf32>
    tpu.vector_store %arg12[%c0_100, %c0_101, %c0_102], %277 {strides = array<i32>} : memref<1x32x256xf32, #tpu.memory_space<vmem>>, vector<1x32x256xf32>,
    return
  }
  func.func @transform_0(%arg0: i32) -> (i32, i32, i32) {
    %c0_i32 = arith.constant 0 : i32
    %c0_i32_0 = arith.constant 0 : i32
    %c0_i32_1 = arith.constant 0 : i32
    return %arg0, %c0_i32, %c0_i32_0 : i32, i32, i32
  }
  func.func @transform_1(%arg0: i32) -> (i32, i32) {
    %c0_i32 = arith.constant 0 : i32
    %c0_i32_0 = arith.constant 0 : i32
    %c0_i32_1 = arith.constant 0 : i32
    return %c0_i32, %c0_i32_0 : i32, i32
  }
  func.func @transform_2(%arg0: i32) -> (i32, i32) {
    %c0_i32 = arith.constant 0 : i32
    %c0_i32_0 = arith.constant 0 : i32
    %c0_i32_1 = arith.constant 0 : i32
    return %c0_i32, %c0_i32_0 : i32, i32
  }
  func.func @transform_3(%arg0: i32) -> (i32, i32) {
    %c0_i32 = arith.constant 0 : i32
    %c0_i32_0 = arith.constant 0 : i32
    %c0_i32_1 = arith.constant 0 : i32
    return %c0_i32, %c0_i32_0 : i32, i32
  }
  func.func @transform_4(%arg0: i32) -> (i32, i32) {
    %c0_i32 = arith.constant 0 : i32
    %c0_i32_0 = arith.constant 0 : i32
    %c0_i32_1 = arith.constant 0 : i32
    return %c0_i32, %c0_i32_0 : i32, i32
  }
  func.func @transform_5(%arg0: i32) -> (i32, i32) {
    %c0_i32 = arith.constant 0 : i32
    %c0_i32_0 = arith.constant 0 : i32
    %c0_i32_1 = arith.constant 0 : i32
    return %c0_i32, %c0_i32_0 : i32, i32
  }
  func.func @transform_6(%arg0: i32) -> (i32, i32) {
    %c0_i32 = arith.constant 0 : i32
    %c0_i32_0 = arith.constant 0 : i32
    %c0_i32_1 = arith.constant 0 : i32
    return %c0_i32, %c0_i32_0 : i32, i32
  }
  func.func @transform_7(%arg0: i32) -> (i32, i32) {
    %c0_i32 = arith.constant 0 : i32
    %c0_i32_0 = arith.constant 0 : i32
    %c0_i32_1 = arith.constant 0 : i32
    return %c0_i32, %c0_i32_0 : i32, i32
  }
  func.func @transform_8(%arg0: i32) -> (i32, i32) {
    %c0_i32 = arith.constant 0 : i32
    %c0_i32_0 = arith.constant 0 : i32
    %c0_i32_1 = arith.constant 0 : i32
    return %c0_i32, %c0_i32_0 : i32, i32
  }
  func.func @transform_9(%arg0: i32) -> (i32, i32) {
    %c0_i32 = arith.constant 0 : i32
    %c0_i32_0 = arith.constant 0 : i32
    %c0_i32_1 = arith.constant 0 : i32
    return %c0_i32, %c0_i32_0 : i32, i32
  }
  func.func @transform_10(%arg0: i32) -> (i32, i32) {
    %c0_i32 = arith.constant 0 : i32
    %c0_i32_0 = arith.constant 0 : i32
    %c0_i32_1 = arith.constant 0 : i32
    return %c0_i32, %c0_i32_0 : i32, i32
  }
  func.func @transform_11(%arg0: i32) -> (i32, i32, i32) {
    %c0_i32 = arith.constant 0 : i32
    %c0_i32_0 = arith.constant 0 : i32
    %c0_i32_1 = arith.constant 0 : i32
    return %arg0, %c0_i32, %c0_i32_0 : i32, i32, i32
  }
}

</mosaic_0001>

<llo_original>
// kernel: tpu_custom_call.1
$region0: #{tpu_custom_call.1}
  #allocation0 [shape = 'u32[]', space=smem, size = 0x4, offset = 0x4, fixed_abs, tag = 'smem constant byte address 0x4 - core index']
  #allocation1 [shape = 'u32[144,128]{1,0:T(1,128)}', space=vmem, size = 0x12000, scoped, tag = 'internal scratch']
  %s0 = inlined_call_operand.vmem [shape: f32[2,8,256], index: 0, kind: input, shape index: {}]
  %s1 = inlined_call_operand.vmem [shape: bf16[40,8], index: 1, kind: input, shape index: {}]
  %s2 = inlined_call_operand.vmem [shape: f32[40,1], index: 2, kind: input, shape index: {}]
  %s3 = inlined_call_operand.vmem [shape: bf16[2,8], index: 3, kind: input, shape index: {}]
  %s4 = inlined_call_operand.vmem [shape: f32[2,1], index: 4, kind: input, shape index: {}]
  %s5 = inlined_call_operand.vmem [shape: bf16[9,2], index: 5, kind: input, shape index: {}]
  %s6 = inlined_call_operand.vmem [shape: f32[9,1], index: 6, kind: input, shape index: {}]
  %s7 = inlined_call_operand.vmem [shape: f32[8,1], index: 7, kind: input, shape index: {}]
  %s8 = inlined_call_operand.vmem [shape: f32[8,1], index: 8, kind: input, shape index: {}]
  %s9 = inlined_call_operand.vmem [shape: bf16[32,8], index: 9, kind: input, shape index: {}]
  %s10 = inlined_call_operand.vmem [shape: f32[32,1], index: 10, kind: input, shape index: {}]
  %s11 = inlined_call_operand.hbm [shape: f32[2,32,256], index: 11, kind: output, shape index: {}]
  %s12 = sld [smem:[#allocation0]]
  $region77: #{tpu_custom_call.1} parent=0
    _
  %s14 = ssub.s32 1, %s12
  %s15 = scalar_select 0, %s14, %s12
  $region1: #{tpu_custom_call.1} parent=0
    #allocation2 [shape = 'u8[65536]{0}', space=vmem, size = 0x10000, scoped, tag = 'output window, operand 0']
    #allocation3 [shape = 's32[2]{0}', space=sflag, size = 0x8, scoped, tag = 'scoped memory for tpu_custom_call.1']
    %16 = vsyncpa [#allocation3], 0
    %s17 = scalar_lea.sflag [#allocation3], 1
    %18 = vsyncpa %s17, 0
    loop: start=0, step=1, limit=4
    $region2: #{tpu_custom_call.1} parent=1 // loop_pre_header
      _
    $region3: #{tpu_custom_call.1} parent=1 // loop_header
      %s20 = sphi 0, %s24
      %p21 = scmp.ge.s32.totalorder %s20, 4
      %s30 = sphi 0, %s32
      %s33 = sphi 0, %s30
      %s34 = sphi 0, %s33
      %s50 = sphi 0, %s34
      %s54 = sphi 0, %s54
      %s56 = sphi 0, %s54
      %s57 = sphi 0, %s56
      %s71 = sphi 0, %s57
      %s75 = sphi 0, %s75
      %s77 = sphi 0, %s75
      %s78 = sphi 0, %s77
      %s92 = sphi 0, %s78
      %s96 = sphi 0, %s96
      %s98 = sphi 0, %s96
      %s99 = sphi 0, %s98
      %s113 = sphi 0, %s99
      %s117 = sphi 0, %s117
      %s119 = sphi 0, %s117
      %s120 = sphi 0, %s119
      %s134 = sphi 0, %s120
      %s138 = sphi 0, %s138
      %s140 = sphi 0, %s138
      %s141 = sphi 0, %s140
      %s155 = sphi 0, %s141
      %s159 = sphi 0, %s159
      %s161 = sphi 0, %s159
      %s162 = sphi 0, %s161
      %s176 = sphi 0, %s162
      %s180 = sphi 0, %s180
      %s182 = sphi 0, %s180
      %s183 = sphi 0, %s182
      %s197 = sphi 0, %s183
      %s201 = sphi 0, %s201
      %s203 = sphi 0, %s201
      %s204 = sphi 0, %s203
      %s218 = sphi 0, %s204
      %s222 = sphi 0, %s222
      %s224 = sphi 0, %s222
      %s225 = sphi 0, %s224
      %s239 = sphi 0, %s225
      %s243 = sphi 0, %s243
      %s245 = sphi 0, %s243
      %s246 = sphi 0, %s245
      %s260 = sphi 0, %s246
      %s266 = sphi 0, %s268
      %s269 = sphi 0, %s266
      %s270 = sphi 0, %s269
      %s286 = sphi 0, %s270
    $region4: #{tpu_custom_call.1} parent=1 // loop_header_branch
      %23 = sbr.rel (%p21) target = $region8
    $region5: #{tpu_custom_call.1} parent=1 // loop_body
      %s25 = ssub.s32 %s20, 1
      %s26 = ssub.s32 %s20, 2
      %s27 = sadd.s32 %s20, 1
      %s28 = ssub.s32 %s20, %s27
      %p29 = scmp.eq.s32.totalorder %s28, 0
      %s31 = sadd.s32 %s30, 1
      %s32 = scalar_select %p29, %s30, %s31
      %p35 = pneg %p29
      %p36 = scmp.eq.s32.totalorder %s20, 1
      %p37 = por %p35, %p36
      %p38 = scmp.ne.s32.totalorder %s30, %s33
      %p39 = scmp.eq.s32.totalorder %s20, 0
      %p40 = por %p38, %p39
      %p41 = scmp.ne.s32.totalorder %s30, %s33
      %p42 = scmp.eq.s32.totalorder %s25, 1
      %p43 = por %p41, %p42
      %p44 = scmp.ne.s32.totalorder %s33, %s34
      %p45 = scmp.eq.s32.totalorder %s25, 0
      %p46 = por %p44, %p45
      %p47 = scmp.ne.s32.totalorder %s33, %s34
      %p48 = scmp.eq.s32.totalorder %s26, 1
      %p49 = por %p47, %p48
      %p51 = scmp.ne.s32.totalorder %s34, %s50
      %p52 = scmp.eq.s32.totalorder %s26, 0
      %p53 = por %p51, %p52
      %s55 = sadd.s32 %s54, 1
      %p58 = scmp.eq.s32.totalorder %s20, 1
      %p59 = scmp.ne.s32.totalorder %s54, %s56
      %p60 = scmp.eq.s32.totalorder %s20, 0
      %p61 = por %p59, %p60
      %p62 = scmp.ne.s32.totalorder %s54, %s56
      %p63 = scmp.eq.s32.totalorder %s25, 1
      %p64 = por %p62, %p63
      %p65 = scmp.ne.s32.totalorder %s56, %s57
      %p66 = scmp.eq.s32.totalorder %s25, 0
      %p67 = por %p65, %p66
      %p68 = scmp.ne.s32.totalorder %s56, %s57
      %p69 = scmp.eq.s32.totalorder %s26, 1
      %p70 = por %p68, %p69
      %p72 = scmp.ne.s32.totalorder %s57, %s71
      %p73 = scmp.eq.s32.totalorder %s26, 0
      %p74 = por %p72, %p73
      %s76 = sadd.s32 %s75, 1
      %p79 = scmp.eq.s32.totalorder %s20, 1
      %p80 = scmp.ne.s32.totalorder %s75, %s77
      %p81 = scmp.eq.s32.totalorder %s20, 0
      %p82 = por %p80, %p81
      %p83 = scmp.ne.s32.totalorder %s75, %s77
      %p84 = scmp.eq.s32.totalorder %s25, 1
      %p85 = por %p83, %p84
      %p86 = scmp.ne.s32.totalorder %s77, %s78
      %p87 = scmp.eq.s32.totalorder %s25, 0
      %p88 = por %p86, %p87
      %p89 = scmp.ne.s32.totalorder %s77, %s78
      %p90 = scmp.eq.s32.totalorder %s26, 1
      %p91 = por %p89, %p90
      %p93 = scmp.ne.s32.totalorder %s78, %s92
      %p94 = scmp.eq.s32.totalorder %s26, 0
      %p95 = por %p93, %p94
      %s97 = sadd.s32 %s96, 1
      %p100 = scmp.eq.s32.totalorder %s20, 1
      %p101 = scmp.ne.s32.totalorder %s96, %s98
      %p102 = scmp.eq.s32.totalorder %s20, 0
      %p103 = por %p101, %p102
      %p104 = scmp.ne.s32.totalorder %s96, %s98
      %p105 = scmp.eq.s32.totalorder %s25, 1
      %p106 = por %p104, %p105
      %p107 = scmp.ne.s32.totalorder %s98, %s99
      %p108 = scmp.eq.s32.totalorder %s25, 0
      %p109 = por %p107, %p108
      %p110 = scmp.ne.s32.totalorder %s98, %s99
      %p111 = scmp.eq.s32.totalorder %s26, 1
      %p112 = por %p110, %p111
      %p114 = scmp.ne.s32.totalorder %s99, %s113
      %p115 = scmp.eq.s32.totalorder %s26, 0
      %p116 = por %p114, %p115
      %s118 = sadd.s32 %s117, 1
      %p121 = scmp.eq.s32.totalorder %s20, 1
      %p122 = scmp.ne.s32.totalorder %s117, %s119
      %p123 = scmp.eq.s32.totalorder %s20, 0
      %p124 = por %p122, %p123
      %p125 = scmp.ne.s32.totalorder %s117, %s119
      %p126 = scmp.eq.s32.totalorder %s25, 1
      %p127 = por %p125, %p126
      %p128 = scmp.ne.s32.totalorder %s119, %s120
      %p129 = scmp.eq.s32.totalorder %s25, 0
      %p130 = por %p128, %p129
      %p131 = scmp.ne.s32.totalorder %s119, %s120
      %p132 = scmp.eq.s32.totalorder %s26, 1
      %p133 = por %p131, %p132
      %p135 = scmp.ne.s32.totalorder %s120, %s134
      %p136 = scmp.eq.s32.totalorder %s26, 0
      %p137 = por %p135, %p136
      %s139 = sadd.s32 %s138, 1
      %p142 = scmp.eq.s32.totalorder %s20, 1
      %p143 = scmp.ne.s32.totalorder %s138, %s140
      %p144 = scmp.eq.s32.totalorder %s20, 0
      %p145 = por %p143, %p144
      %p146 = scmp.ne.s32.totalorder %s138, %s140
      %p147 = scmp.eq.s32.totalorder %s25, 1
      %p148 = por %p146, %p147
      %p149 = scmp.ne.s32.totalorder %s140, %s141
      %p150 = scmp.eq.s32.totalorder %s25, 0
      %p151 = por %p149, %p150
      %p152 = scmp.ne.s32.totalorder %s140, %s141
      %p153 = scmp.eq.s32.totalorder %s26, 1
      %p154 = por %p152, %p153
      %p156 = scmp.ne.s32.totalorder %s141, %s155
      %p157 = scmp.eq.s32.totalorder %s26, 0
      %p158 = por %p156, %p157
      %s160 = sadd.s32 %s159, 1
      %p163 = scmp.eq.s32.totalorder %s20, 1
      %p164 = scmp.ne.s32.totalorder %s159, %s161
      %p165 = scmp.eq.s32.totalorder %s20, 0
      %p166 = por %p164, %p165
      %p167 = scmp.ne.s32.totalorder %s159, %s161
      %p168 = scmp.eq.s32.totalorder %s25, 1
      %p169 = por %p167, %p168
      %p170 = scmp.ne.s32.totalorder %s161, %s162
      %p171 = scmp.eq.s32.totalorder %s25, 0
      %p172 = por %p170, %p171
      %p173 = scmp.ne.s32.totalorder %s161, %s162
      %p174 = scmp.eq.s32.totalorder %s26, 1
      %p175 = por %p173, %p174
      %p177 = scmp.ne.s32.totalorder %s162, %s176
      %p178 = scmp.eq.s32.totalorder %s26, 0
      %p179 = por %p177, %p178
      %s181 = sadd.s32 %s180, 1
      %p184 = scmp.eq.s32.totalorder %s20, 1
      %p185 = scmp.ne.s32.totalorder %s180, %s182
      %p186 = scmp.eq.s32.totalorder %s20, 0
      %p187 = por %p185, %p186
      %p188 = scmp.ne.s32.totalorder %s180, %s182
      %p189 = scmp.eq.s32.totalorder %s25, 1
      %p190 = por %p188, %p189
      %p191 = scmp.ne.s32.totalorder %s182, %s183
      %p192 = scmp.eq.s32.totalorder %s25, 0
      %p193 = por %p191, %p192
      %p194 = scmp.ne.s32.totalorder %s182, %s183
      %p195 = scmp.eq.s32.totalorder %s26, 1
      %p196 = por %p194, %p195
      %p198 = scmp.ne.s32.totalorder %s183, %s197
      %p199 = scmp.eq.s32.totalorder %s26, 0
      %p200 = por %p198, %p199
      %s202 = sadd.s32 %s201, 1
      %p205 = scmp.eq.s32.totalorder %s20, 1
      %p206 = scmp.ne.s32.totalorder %s201, %s203
      %p207 = scmp.eq.s32.totalorder %s20, 0
      %p208 = por %p206, %p207
      %p209 = scmp.ne.s32.totalorder %s201, %s203
      %p210 = scmp.eq.s32.totalorder %s25, 1
      %p211 = por %p209, %p210
      %p212 = scmp.ne.s32.totalorder %s203, %s204
      %p213 = scmp.eq.s32.totalorder %s25, 0
      %p214 = por %p212, %p213
      %p215 = scmp.ne.s32.totalorder %s203, %s204
      %p216 = scmp.eq.s32.totalorder %s26, 1
      %p217 = por %p215, %p216
      %p219 = scmp.ne.s32.totalorder %s204, %s218
      %p220 = scmp.eq.s32.totalorder %s26, 0
      %p221 = por %p219, %p220
      %s223 = sadd.s32 %s222, 1
      %p226 = scmp.eq.s32.totalorder %s20, 1
      %p227 = scmp.ne.s32.totalorder %s222, %s224
      %p228 = scmp.eq.s32.totalorder %s20, 0
      %p229 = por %p227, %p228
      %p230 = scmp.ne.s32.totalorder %s222, %s224
      %p231 = scmp.eq.s32.totalorder %s25, 1
      %p232 = por %p230, %p231
      %p233 = scmp.ne.s32.totalorder %s224, %s225
      %p234 = scmp.eq.s32.totalorder %s25, 0
      %p235 = por %p233, %p234
      %p236 = scmp.ne.s32.totalorder %s224, %s225
      %p237 = scmp.eq.s32.totalorder %s26, 1
      %p238 = por %p236, %p237
      %p240 = scmp.ne.s32.totalorder %s225, %s239
      %p241 = scmp.eq.s32.totalorder %s26, 0
      %p242 = por %p240, %p241
      %s244 = sadd.s32 %s243, 1
      %p247 = scmp.eq.s32.totalorder %s20, 1
      %p248 = scmp.ne.s32.totalorder %s243, %s245
      %p249 = scmp.eq.s32.totalorder %s20, 0
      %p250 = por %p248, %p249
      %p251 = scmp.ne.s32.totalorder %s243, %s245
      %p252 = scmp.eq.s32.totalorder %s25, 1
      %p253 = por %p251, %p252
      %p254 = scmp.ne.s32.totalorder %s245, %s246
      %p255 = scmp.eq.s32.totalorder %s25, 0
      %p256 = por %p254, %p255
      %p257 = scmp.ne.s32.totalorder %s245, %s246
      %p258 = scmp.eq.s32.totalorder %s26, 1
      %p259 = por %p257, %p258
      %p261 = scmp.ne.s32.totalorder %s246, %s260
      %p262 = scmp.eq.s32.totalorder %s26, 0
      %p263 = por %p261, %p262
      %s264 = ssub.s32 %s20, %s27
      %p265 = scmp.eq.s32.totalorder %s264, 0
      %s267 = sadd.s32 %s266, 1
      %s268 = scalar_select %p265, %s266, %s267
      %p271 = pneg %p265
      %p272 = scmp.eq.s32.totalorder %s20, 1
      %p273 = por %p271, %p272
      %p274 = scmp.ne.s32.totalorder %s266, %s269
      %p275 = scmp.eq.s32.totalorder %s20, 0
      %p276 = por %p274, %p275
      %p277 = scmp.ne.s32.totalorder %s266, %s269
      %p278 = scmp.eq.s32.totalorder %s25, 1
      %p279 = por %p277, %p278
      %p280 = scmp.ne.s32.totalorder %s269, %s270
      %p281 = scmp.eq.s32.totalorder %s25, 0
      %p282 = por %p280, %p281
      %p283 = scmp.ne.s32.totalorder %s269, %s270
      %p284 = scmp.eq.s32.totalorder %s26, 1
      %p285 = por %p283, %p284
      %p287 = scmp.ne.s32.totalorder %s270, %s286
      %p288 = scmp.eq.s32.totalorder %s26, 0
      %p289 = por %p287, %p288
      %p290 = scmp.le.s32.totalorder 1, %s20
      %p291 = scmp.lt.s32.totalorder %s20, 3
      %p292 = pnand %p290, %p291
      %p293 = pneg %p292
      // Predicated region
      $region9: #{tpu_custom_call.1} parent=5 // pred_check
        _
      $region10: #{tpu_custom_call.1} parent=5 // pred_check_branch
        %295 = sbr.rel (%p292) target = $region12
      $region11: #{tpu_custom_call.1} parent=5 // pred_region
        %s296 = ssub.s32 %s20, 1
        // Predicated region
        $region13: #{tpu_custom_call.1} parent=11 // pred_check
          %p297 = pneg %p67
        $region14: #{tpu_custom_call.1} parent=11 // pred_check_branch
          %299 = sbr.rel (%p297) target = $region16
        $region15: #{tpu_custom_call.1} parent=11 // pred_region
          _
        $region16: #{tpu_custom_call.1} parent=11 // pred_fallthru
          _
        // Predicated region
        $region17: #{tpu_custom_call.1} parent=11 // pred_check
          %p300 = pneg %p88
        $region18: #{tpu_custom_call.1} parent=11 // pred_check_branch
          %302 = sbr.rel (%p300) target = $region20
        $region19: #{tpu_custom_call.1} parent=11 // pred_region
          _
        $region20: #{tpu_custom_call.1} parent=11 // pred_fallthru
          _
        // Predicated region
        $region21: #{tpu_custom_call.1} parent=11 // pred_check
          %p303 = pneg %p109
        $region22: #{tpu_custom_call.1} parent=11 // pred_check_branch
          %305 = sbr.rel (%p303) target = $region24
        $region23: #{tpu_custom_call.1} parent=11 // pred_region
          _
        $region24: #{tpu_custom_call.1} parent=11 // pred_fallthru
          _
        // Predicated region
        $region25: #{tpu_custom_call.1} parent=11 // pred_check
          %p306 = pneg %p130
        $region26: #{tpu_custom_call.1} parent=11 // pred_check_branch
          %308 = sbr.rel (%p306) target = $region28
        $region27: #{tpu_custom_call.1} parent=11 // pred_region
          _
        $region28: #{tpu_custom_call.1} parent=11 // pred_fallthru
          _
        // Predicated region
        $region29: #{tpu_custom_call.1} parent=11 // pred_check
          %p309 = pneg %p151
        $region30: #{tpu_custom_call.1} parent=11 // pred_check_branch
          %311 = sbr.rel (%p309) target = $region32
        $region31: #{tpu_custom_call.1} parent=11 // pred_region
          _
        $region32: #{tpu_custom_call.1} parent=11 // pred_fallthru
          _
        // Predicated region
        $region33: #{tpu_custom_call.1} parent=11 // pred_check
          %p312 = pneg %p172
        $region34: #{tpu_custom_call.1} parent=11 // pred_check_branch
          %314 = sbr.rel (%p312) target = $region36
        $region35: #{tpu_custom_call.1} parent=11 // pred_region
          _
        $region36: #{tpu_custom_call.1} parent=11 // pred_fallthru
          _
        // Predicated region
        $region37: #{tpu_custom_call.1} parent=11 // pred_check
          %p315 = pneg %p193
        $region38: #{tpu_custom_call.1} parent=11 // pred_check_branch
          %317 = sbr.rel (%p315) target = $region40
        $region39: #{tpu_custom_call.1} parent=11 // pred_region
          _
        $region40: #{tpu_custom_call.1} parent=11 // pred_fallthru
          _
        // Predicated region
        $region41: #{tpu_custom_call.1} parent=11 // pred_check
          %p318 = pneg %p214
        $region42: #{tpu_custom_call.1} parent=11 // pred_check_branch
          %320 = sbr.rel (%p318) target = $region44
        $region43: #{tpu_custom_call.1} parent=11 // pred_region
          _
        $region44: #{tpu_custom_call.1} parent=11 // pred_fallthru
          _
        // Predicated region
        $region45: #{tpu_custom_call.1} parent=11 // pred_check
          %p321 = pneg %p235
        $region46: #{tpu_custom_call.1} parent=11 // pred_check_branch
          %323 = sbr.rel (%p321) target = $region48
        $region47: #{tpu_custom_call.1} parent=11 // pred_region
          _
        $region48: #{tpu_custom_call.1} parent=11 // pred_fallthru
          _
        // Predicated region
        $region49: #{tpu_custom_call.1} parent=11 // pred_check
          %p324 = pneg %p256
        $region50: #{tpu_custom_call.1} parent=11 // pred_check_branch
          %326 = sbr.rel (%p324) target = $region52
        $region51: #{tpu_custom_call.1} parent=11 // pred_region
          _
        $region52: #{tpu_custom_call.1} parent=11 // pred_fallthru
          _
      $region12: #{tpu_custom_call.1} parent=5 // pred_fallthru
        _
      %p327 = scmp.lt.s32.totalorder %s20, 2
      // Predicated region
      $region53: #{tpu_custom_call.1} parent=5 // pred_check
        %p328 = pneg %p327
      $region54: #{tpu_custom_call.1} parent=5 // pred_check_branch
        %330 = sbr.rel (%p328) target = $region56
      $region55: #{tpu_custom_call.1} parent=5 // pred_region
        // Predicated region
        $region57: #{tpu_custom_call.1} parent=55 // pred_check
          %p331 = pneg %p40
        $region58: #{tpu_custom_call.1} parent=55 // pred_check_branch
          %333 = sbr.rel (%p331) target = $region60
        $region59: #{tpu_custom_call.1} parent=55 // pred_region
          %p334 = scmp.lt.s32.totalorder %s20, 1
          %s335 = scalar_select %p334, %s20, 1
          %s336 = smul.addr %s335, 2
          %s337 = smul.addr %s336, 8
          %s338 = scalar_lea.vmem %s0, %s337
        $region60: #{tpu_custom_call.1} parent=55 // pred_fallthru
          _
      $region56: #{tpu_custom_call.1} parent=5 // pred_fallthru
        _
      %p339 = scmp.le.s32.totalorder 1, %s20
      %p340 = scmp.lt.s32.totalorder %s20, 3
      %p341 = pnand %p339, %p340
      %p342 = pneg %p341
      // Predicated region
      $region61: #{tpu_custom_call.1} parent=5 // pred_check
        _
      $region62: #{tpu_custom_call.1} parent=5 // pred_check_branch
        %344 = sbr.rel (%p341) target = $region64
      $region63: #{tpu_custom_call.1} parent=5 // pred_region
        %s345 = ssub.s32 %s20, 1
        %p346 = scmp.lt.s32.totalorder %s25, 1
        %s347 = scalar_select %p346, %s25, 1
        %s348 = smul.addr %s347, 2
        %s349 = smul.addr %s348, 8
        %s350 = scalar_lea.vmem %s0, %s349
        %p351 = pneg %p46
        %p352 = pneg %p43
        %p353 = pneg %p67
        %p354 = pneg %p64
        %p355 = pneg %p88
        %p356 = pneg %p85
        %p357 = pneg %p109
        %p358 = pneg %p106
        %p359 = pneg %p130
        %p360 = pneg %p127
        %p361 = pneg %p151
        %p362 = pneg %p148
        %p363 = pneg %p172
        %p364 = pneg %p169
        %p365 = pneg %p193
        %p366 = pneg %p190
        %p367 = pneg %p214
        %p368 = pneg %p211
        %p369 = pneg %p235
        %p370 = pneg %p232
        %p371 = pneg %p256
        %p372 = pneg %p253
        %p373 = pneg %p282
        %p374 = pneg %p279
        %s375 = sand.u32 %s269, 1
        %s376 = scalar_lea.sflag [#allocation3], %s375
        %s377 = sand.u32 %s269, 1
        %s378 = smul.addr %s377, 64
        %s379 = scalar_lea.vmem [#allocation2], %s378
        %p380 = scmp.lt.s32.totalorder %s25, 1
        %s381 = scalar_select %p380, %s25, 1
        %s382 = smul.addr %s381, 2
        %s383 = smul.addr %s382, 8
        %s384 = scalar_lea.vmem %s0, %s383
        %v386 = vlaneseq
        %v387 = vand.u32 %v386, 127
        %v388 = vadd.s32 %v387, 128
        %v389 = vshra.s32 %v387, 4
        %v390 = vshra.s32 %v388, 4
        %v391 = vand.u32 %v387, 15
        %v392 = vand.u32 %v388, 15
        %v393 = vld [vmem:[%s1] sm:$0xf]
        %v394 = vld [vmem:[%s1 + $0x4] sm:$0xf]
        %v395 = vld [vmem:[%s1 + $0x8] sm:$0xf]
        %v396 = vld [vmem:[%s1 + $0xc] sm:$0xf]
        %v397 = vld [vmem:[%s1 + $0x10] sm:$0xf]
        %v398 = vld [vmem:[%s2] sm:$0xff]
        %v399 = vld [vmem:[%s2 + $0x8] sm:$0xff]
        %v400 = vld [vmem:[%s2 + $0x10] sm:$0xff]
        %v401 = vld [vmem:[%s2 + $0x18] sm:$0xff]
        %v402 = vld [vmem:[%s2 + $0x20] sm:$0xff]
        %v403 = vld [vmem:[%s3] sm:$0x1]
        %v404 = vld [vmem:[%s4] sm:$0x3]
        %v405 = vld [vmem:[%s5] sm:$0xf]
        %v406 = vld [vmem:[%s5 + $0x4] sm:$0x1]
        %v407 = vld [vmem:[%s6] sm:$0xff]
        %v408 = vld [vmem:[%s6 + $0x8] sm:$0x1]
        %v409 = vld [vmem:[%s7] sm:$0xff]
        %v410 = vld [vmem:[%s8] sm:$0xff]
        %v411 = vld [vmem:[%s9] sm:$0xf]
        %v412 = vld [vmem:[%s9 + $0x4] sm:$0xf]
        %v413 = vld [vmem:[%s9 + $0x8] sm:$0xf]
        %v414 = vld [vmem:[%s9 + $0xc] sm:$0xf]
        %v415 = vld [vmem:[%s10] sm:$0xff]
        %v416 = vld [vmem:[%s10 + $0x8] sm:$0xff]
        %v417 = vld [vmem:[%s10 + $0x10] sm:$0xff]
        %v418 = vld [vmem:[%s10 + $0x18] sm:$0xff]
        %v419 = vld [vmem:[%s384] sm:$0xff]
        %v420 = vld [vmem:[%s384 + $0x8] sm:$0xff]
        %v421 = vpack.c.bf16 %v419, %v419
        %v422 = vpack.c.bf16 %v420, %v420
        %424 = vset.pattern.permute.xlu0 0
        %425 = vperm.xlu0 %424, %v398
        %v426 = vpop.permute.xlu0 %425
        %429 = vset.pattern.permute.xlu0 0
        %430 = vperm.xlu0 %429, %v399
        %v431 = vpop.permute.xlu0 %430
        %434 = vset.pattern.permute.xlu0 0
        %435 = vperm.xlu0 %434, %v400
        %v436 = vpop.permute.xlu0 %435
        %439 = vset.pattern.permute.xlu0 0
        %440 = vperm.xlu0 %439, %v401
        %v441 = vpop.permute.xlu0 %440
        %444 = vset.pattern.permute.xlu0 0
        %445 = vperm.xlu0 %444, %v402
        %v446 = vpop.permute.xlu0 %445
        %v453 = vunpack.c.l.b16 %v393
        %v454 = vunpack.c.l.b16 %v394
        %v455 = vunpack.c.l.b16 %v395
        %v456 = vunpack.c.l.b16 %v396
        %v457 = vunpack.c.l.b16 %v397
        %v458 = vpack.c.b16 %v454, %v453
        %v459 = vpack.c.b16 %v456, %v455
        %v460 = vpack.c.b16 %v457, %v457
        %vm461 = vcmask 64512
        %v463 = vsel %vm461, %v458, 0
        %v466 = vsel %vm461, %v459, 0
        %v469 = vsel %vm461, %v460, 0
        %vm471 = vcmask 1043456
        %v473 = vsel %vm471, %v421, 0
        %v476 = vsel %vm471, %v422, 0
        %478 = vmatprep.subr.bf16.mxu0 0
        %479 = vmatpush1.bf16.msra.mxu0 0
        %480 = vmatprep.subr.bf16.mxu0 0
        %481 = vmatpush1.bf16.msra.mxu0 0
        %482 = vmatprep.subr.bf16.mxu0 0
        %483 = vmatpush1.bf16.msra.mxu0 0
        %484 = vmatprep.subr.bf16.mxu0 0
        %485 = vmatpush1.bf16.msra.mxu0 0
        %486 = vmatprep.subr.bf16.mxu0 0
        %487 = vmatpush1.bf16.msra.mxu0 0
        %488 = vmatprep.subr.bf16.mxu0 0
        %489 = vmatpush1.bf16.msra.mxu0 0
        %490 = vmatprep.subr.bf16.mxu0 0
        %491 = vmatpush1.bf16.msra.mxu0 0
        %492 = vmatprep.subr.bf16.mxu0 %v476
        %493 = vmatpush1.bf16.msra.mxu0 %v473
        %494 = vmatprep.subr.bf16.mxu0 0
        %495 = vmatpush2.bf16.msra.mxu0 0
        %496 = vmatprep.subr.bf16.mxu0 0
        %497 = vmatpush2.bf16.msra.mxu0 0
        %498 = vmatprep.subr.bf16.mxu0 0
        %499 = vmatpush2.bf16.msra.mxu0 0
        %500 = vmatprep.subr.bf16.mxu0 0
        %501 = vmatpush2.bf16.msra.mxu0 0
        %502 = vmatprep.subr.bf16.mxu0 0
        %503 = vmatpush2.bf16.msra.mxu0 0
        %504 = vmatprep.subr.bf16.mxu0 0
        %505 = vmatpush2.bf16.msra.mxu0 0
        %506 = vmatprep.subr.bf16.mxu0 0
        %507 = vmatpush2.bf16.msra.mxu0 0
        %508 = vmatprep.subr.bf16.mxu0 0
        %509 = vmatpush2.bf16.msra.mxu0 0
        %510 = vmatprep.mubr.bf16.mxu0 0
        %511 = vmatmul.mubr.bf16.gmra.mxu0 %v463
        %v512 = vpop.f32.mrf.mxu0
        %v513 = vadd.f32 %v426, %v512
        %v514 = vpop.f32.mrf.mxu0
        %v515 = vadd.f32 %v426, %v514
        %v516 = vpop.f32.mrf.mxu0
        %v517 = vadd.f32 %v431, %v516
        %v518 = vpop.f32.mrf.mxu0
        %v519 = vadd.f32 %v431, %v518
        %520 = vmatprep.mubr.bf16.mxu0 0
        %521 = vmatmul.mubr.bf16.gmra.mxu0 %v466
        %v522 = vpop.f32.mrf.mxu0
        %v523 = vadd.f32 %v436, %v522
        %v524 = vpop.f32.mrf.mxu0
        %v525 = vadd.f32 %v436, %v524
        %v526 = vpop.f32.mrf.mxu0
        %v527 = vadd.f32 %v441, %v526
        %v528 = vpop.f32.mrf.mxu0
        %v529 = vadd.f32 %v441, %v528
        %530 = vmatprep.mubr.bf16.mxu0 0
        %531 = vmatmul.mubr.bf16.gmra.mxu0 %v469
        %v532 = vpop.f32.mrf.mxu0
        %v533 = vadd.f32 %v446, %v532
        %v534 = vpop.f32.mrf.mxu0
        %v535 = vadd.f32 %v446, %v534
        %v536 = vpop.f32.mrf.mxu0
        %v537 = vpop.f32.mrf.mxu0
        %538 = vdwg.mxu0
        %v539 = vmax.f32 %v513, 0.0
        %v540 = vmax.f32 %v515, 0.0
        %v541 = vmax.f32 %v517, 0.0
        %v542 = vmax.f32 %v519, 0.0
        %v543 = vmax.f32 %v523, 0.0
        %v544 = vmax.f32 %v525, 0.0
        %v545 = vmax.f32 %v527, 0.0
        %v546 = vmax.f32 %v529, 0.0
        %v547 = vmax.f32 %v533, 0.0
        %v548 = vmax.f32 %v535, 0.0
        %v549 = vpack.c.bf16 %v539, %v539
        %v550 = vpack.c.bf16 %v540, %v540
        %552 = vset.pattern.permute.xlu0 0
        %553 = vperm.xlu0 %552, %v404
        %v554 = vpop.permute.xlu0 %553
        %v557 = vsel %vm461, %v403, 0
        %v560 = vsel %vm471, %v549, 0
        %v563 = vsel %vm471, %v550, 0
        %565 = vmatprep.subr.bf16.mxu0 0
        %566 = vmatpush1.bf16.msra.mxu0 0
        %567 = vmatprep.subr.bf16.mxu0 0
        %568 = vmatpush1.bf16.msra.mxu0 0
        %569 = vmatprep.subr.bf16.mxu0 0
        %570 = vmatpush1.bf16.msra.mxu0 0
        %571 = vmatprep.subr.bf16.mxu0 0
        %572 = vmatpush1.bf16.msra.mxu0 0
        %573 = vmatprep.subr.bf16.mxu0 0
        %574 = vmatpush1.bf16.msra.mxu0 0
        %575 = vmatprep.subr.bf16.mxu0 0
        %576 = vmatpush1.bf16.msra.mxu0 0
        %577 = vmatprep.subr.bf16.mxu0 0
        %578 = vmatpush1.bf16.msra.mxu0 0
        %579 = vmatprep.subr.bf16.mxu0 %v563
        %580 = vmatpush1.bf16.msra.mxu0 %v560
        %581 = vmatprep.subr.bf16.mxu0 0
        %582 = vmatpush2.bf16.msra.mxu0 0
        %583 = vmatprep.subr.bf16.mxu0 0
        %584 = vmatpush2.bf16.msra.mxu0 0
        %585 = vmatprep.subr.bf16.mxu0 0
        %586 = vmatpush2.bf16.msra.mxu0 0
        %587 = vmatprep.subr.bf16.mxu0 0
        %588 = vmatpush2.bf16.msra.mxu0 0
        %589 = vmatprep.subr.bf16.mxu0 0
        %590 = vmatpush2.bf16.msra.mxu0 0
        %591 = vmatprep.subr.bf16.mxu0 0
        %592 = vmatpush2.bf16.msra.mxu0 0
        %593 = vmatprep.subr.bf16.mxu0 0
        %594 = vmatpush2.bf16.msra.mxu0 0
        %595 = vmatprep.subr.bf16.mxu0 0
        %596 = vmatpush2.bf16.msra.mxu0 0
        %597 = vmatprep.mubr.bf16.mxu0 0
        %598 = vmatmul.mubr.bf16.gmra.mxu0 %v557
        %v599 = vpop.f32.mrf.mxu0
        %v600 = vadd.f32 %v554, %v599
        %v601 = vpop.f32.mrf.mxu0
        %v602 = vadd.f32 %v554, %v601
        %v603 = vpop.f32.mrf.mxu0
        %v604 = vpop.f32.mrf.mxu0
        %605 = vdwg.mxu0
        %v606 = vmax.f32 %v600, 0.0
        %v607 = vmax.f32 %v602, 0.0
        %v608 = vpack.c.bf16 %v606, %v606
        %v609 = vpack.c.bf16 %v607, %v607
        %611 = vset.pattern.permute.xlu0 0
        %612 = vperm.xlu0 %611, %v407
        %v613 = vpop.permute.xlu0 %612
        %616 = vset.pattern.permute.xlu0 0
        %617 = vperm.xlu0 %616, %v408
        %v618 = vpop.permute.xlu0 %617
        %v622 = vunpack.c.l.b16 %v405
        %v623 = vunpack.c.l.b16 %v406
        %v624 = vpack.c.b16 %v623, %v622
        %vm625 = vcmask 15360
        %v627 = vsel %vm625, %v624, 0
        %vm629 = vcmask 1040384
        %v631 = vsel %vm629, %v608, 0
        %v634 = vsel %vm629, %v609, 0
        %636 = vmatprep.subr.bf16.mxu0 0
        %637 = vmatpush1.bf16.msra.mxu0 0
        %638 = vmatprep.subr.bf16.mxu0 0
        %639 = vmatpush1.bf16.msra.mxu0 0
        %640 = vmatprep.subr.bf16.mxu0 0
        %641 = vmatpush1.bf16.msra.mxu0 0
        %642 = vmatprep.subr.bf16.mxu0 0
        %643 = vmatpush1.bf16.msra.mxu0 0
        %644 = vmatprep.subr.bf16.mxu0 0
        %645 = vmatpush1.bf16.msra.mxu0 0
        %646 = vmatprep.subr.bf16.mxu0 0
        %647 = vmatpush1.bf16.msra.mxu0 0
        %648 = vmatprep.subr.bf16.mxu0 0
        %649 = vmatpush1.bf16.msra.mxu0 0
        %650 = vmatprep.subr.bf16.mxu0 %v634
        %651 = vmatpush1.bf16.msra.mxu0 %v631
        %652 = vmatprep.subr.bf16.mxu0 0
        %653 = vmatpush2.bf16.msra.mxu0 0
        %654 = vmatprep.subr.bf16.mxu0 0
        %655 = vmatpush2.bf16.msra.mxu0 0
        %656 = vmatprep.subr.bf16.mxu0 0
        %657 = vmatpush2.bf16.msra.mxu0 0
        %658 = vmatprep.subr.bf16.mxu0 0
        %659 = vmatpush2.bf16.msra.mxu0 0
        %660 = vmatprep.subr.bf16.mxu0 0
        %661 = vmatpush2.bf16.msra.mxu0 0
        %662 = vmatprep.subr.bf16.mxu0 0
        %663 = vmatpush2.bf16.msra.mxu0 0
        %664 = vmatprep.subr.bf16.mxu0 0
        %665 = vmatpush2.bf16.msra.mxu0 0
        %666 = vmatprep.subr.bf16.mxu0 0
        %667 = vmatpush2.bf16.msra.mxu0 0
        %668 = vmatprep.mubr.bf16.mxu0 0
        %669 = vmatmul.mubr.bf16.gmra.mxu0 %v627
        %v670 = vpop.f32.mrf.mxu0
        %v671 = vadd.f32 %v613, %v670
        %v672 = vpop.f32.mrf.mxu0
        %v673 = vadd.f32 %v613, %v672
        %v674 = vpop.f32.mrf.mxu0
        %v675 = vadd.f32 %v618, %v674
        %v676 = vpop.f32.mrf.mxu0
        %v677 = vadd.f32 %v618, %v676
        %678 = vdwg.mxu0
        %v679 = vlaneseq
        %v680 = vshrl.u32 %v679, 7
        %v681 = vsub.s32 4, %v680
        %v682 = vrot.slane %v671, %v681
        %v683 = vlaneseq
        %v684 = vshrl.u32 %v683, 7
        %v685 = vsub.s32 4, %v684
        %v686 = vrot.slane %v673, %v685
        %v687 = vmul.f32 %v539, %v682
        %v688 = vmul.f32 %v540, %v686
        %689 = vrot.lane.b32.xlu0 %v539, 17
        %v690 = vpop.permute.xlu0 %689
        %691 = vrot.lane.b32.xlu0 %v540, 17
        %v692 = vpop.permute.xlu0 %691
        %vm693 = vcmp.lt.s32.totalorder %v387, 17
        %v694 = vsel %vm693, %v690, %v692
        %v695 = vsel %vm693, %v692, %v690
        %v696 = vadd.s32 %v389, 4294967295
        %v697 = vadd.s32 %v390, 4294967295
        %vm698 = vcmp.ge.s32.totalorder %v696, 0
        %vm699 = vcmp.ge.s32.totalorder %v697, 0
        %vm700 = vcmp.lt.s32.totalorder %v696, 16
        %vm701 = vcmp.lt.s32.totalorder %v697, 16
        %vm702 = vmand %vm698, %vm700
        %vm703 = vmand %vm699, %vm701
        %v704 = vadd.s32 %v391, 4294967295
        %v705 = vadd.s32 %v392, 4294967295
        %vm706 = vcmp.ge.s32.totalorder %v704, 0
        %vm707 = vcmp.ge.s32.totalorder %v705, 0
        %vm708 = vmand %vm702, %vm706
        %vm709 = vmand %vm703, %vm707
        %vm710 = vcmp.lt.s32.totalorder %v704, 16
        %vm711 = vcmp.lt.s32.totalorder %v705, 16
        %vm712 = vmand %vm708, %vm710
        %vm713 = vmand %vm709, %vm711
        %v714 = vsel %vm712, 1, 0
        %v715 = vsel %vm713, 1, 0
        %vm716 = vcmp.eq.s32.totalorder %v714, 1
        %vm717 = vcmp.eq.s32.totalorder %v715, 1
        %v718 = vsel %vm716, %v695, 0.0
        %v719 = vsel %vm717, %v694, 0.0
        %v720 = vlaneseq
        %v721 = vshrl.u32 %v720, 7
        %v722 = vsub.s32 0, %v721
        %v723 = vrot.slane %v671, %v722
        %v724 = vlaneseq
        %v725 = vshrl.u32 %v724, 7
        %v726 = vsub.s32 0, %v725
        %v727 = vrot.slane %v673, %v726
        %v728 = vmul.f32 %v718, %v723
        %v729 = vmul.f32 %v719, %v727
        %v730 = vadd.f32 %v687, %v728
        %v731 = vadd.f32 %v688, %v729
        %732 = vrot.lane.b32.xlu0 %v539, 16
        %v733 = vpop.permute.xlu0 %732
        %734 = vrot.lane.b32.xlu0 %v540, 16
        %v735 = vpop.permute.xlu0 %734
        %vm736 = vcmp.lt.s32.totalorder %v387, 16
        %v737 = vsel %vm736, %v733, %v735
        %v738 = vsel %vm736, %v735, %v733
        %vm739 = vcmp.ge.s32.totalorder %v391, 0
        %vm740 = vcmp.ge.s32.totalorder %v392, 0
        %vm741 = vmand %vm702, %vm739
        %vm742 = vmand %vm703, %vm740
        %vm743 = vcmp.lt.s32.totalorder %v391, 16
        %vm744 = vcmp.lt.s32.totalorder %v392, 16
        %vm745 = vmand %vm741, %vm743
        %vm746 = vmand %vm742, %vm744
        %v747 = vsel %vm745, 1, 0
        %v748 = vsel %vm746, 1, 0
        %vm749 = vcmp.eq.s32.totalorder %v747, 1
        %vm750 = vcmp.eq.s32.totalorder %v748, 1
        %v751 = vsel %vm749, %v738, 0.0
        %v752 = vsel %vm750, %v737, 0.0
        %v753 = vlaneseq
        %v754 = vshrl.u32 %v753, 7
        %v755 = vsub.s32 1, %v754
        %v756 = vrot.slane %v671, %v755
        %v757 = vlaneseq
        %v758 = vshrl.u32 %v757, 7
        %v759 = vsub.s32 1, %v758
        %v760 = vrot.slane %v673, %v759
        %v761 = vmul.f32 %v751, %v756
        %v762 = vmul.f32 %v752, %v760
        %v763 = vadd.f32 %v730, %v761
        %v764 = vadd.f32 %v731, %v762
        %765 = vrot.lane.b32.xlu0 %v539, 15
        %v766 = vpop.permute.xlu0 %765
        %767 = vrot.lane.b32.xlu0 %v540, 15
        %v768 = vpop.permute.xlu0 %767
        %vm769 = vcmp.lt.s32.totalorder %v387, 15
        %v770 = vsel %vm769, %v766, %v768
        %v771 = vsel %vm769, %v768, %v766
        %v772 = vadd.s32 %v391, 1
        %v773 = vadd.s32 %v392, 1
        %vm774 = vcmp.ge.s32.totalorder %v772, 0
        %vm775 = vcmp.ge.s32.totalorder %v773, 0
        %vm776 = vmand %vm702, %vm774
        %vm777 = vmand %vm703, %vm775
        %vm778 = vcmp.lt.s32.totalorder %v772, 16
        %vm779 = vcmp.lt.s32.totalorder %v773, 16
        %vm780 = vmand %vm776, %vm778
        %vm781 = vmand %vm777, %vm779
        %v782 = vsel %vm780, 1, 0
        %v783 = vsel %vm781, 1, 0
        %vm784 = vcmp.eq.s32.totalorder %v782, 1
        %vm785 = vcmp.eq.s32.totalorder %v783, 1
        %v786 = vsel %vm784, %v771, 0.0
        %v787 = vsel %vm785, %v770, 0.0
        %v788 = vlaneseq
        %v789 = vshrl.u32 %v788, 7
        %v790 = vsub.s32 2, %v789
        %v791 = vrot.slane %v671, %v790
        %v792 = vlaneseq
        %v793 = vshrl.u32 %v792, 7
        %v794 = vsub.s32 2, %v793
        %v795 = vrot.slane %v673, %v794
        %v796 = vmul.f32 %v786, %v791
        %v797 = vmul.f32 %v787, %v795
        %v798 = vadd.f32 %v763, %v796
        %v799 = vadd.f32 %v764, %v797
        %800 = vrot.lane.b32.xlu0 %v539, 1
        %v801 = vpop.permute.xlu0 %800
        %802 = vrot.lane.b32.xlu0 %v540, 1
        %v803 = vpop.permute.xlu0 %802
        %vm804 = vcmp.lt.s32.totalorder %v387, 1
        %v805 = vsel %vm804, %v801, %v803
        %v806 = vsel %vm804, %v803, %v801
        %vm807 = vcmp.ge.s32.totalorder %v389, 0
        %vm808 = vcmp.ge.s32.totalorder %v390, 0
        %vm809 = vcmp.lt.s32.totalorder %v389, 16
        %vm810 = vcmp.lt.s32.totalorder %v390, 16
        %vm811 = vmand %vm807, %vm809
        %vm812 = vmand %vm808, %vm810
        %vm813 = vmand %vm811, %vm706
        %vm814 = vmand %vm812, %vm707
        %vm815 = vmand %vm813, %vm710
        %vm816 = vmand %vm814, %vm711
        %v817 = vsel %vm815, 1, 0
        %v818 = vsel %vm816, 1, 0
        %vm819 = vcmp.eq.s32.totalorder %v817, 1
        %vm820 = vcmp.eq.s32.totalorder %v818, 1
        %v821 = vsel %vm819, %v806, 0.0
        %v822 = vsel %vm820, %v805, 0.0
        %v823 = vlaneseq
        %v824 = vshrl.u32 %v823, 7
        %v825 = vsub.s32 3, %v824
        %v826 = vrot.slane %v671, %v825
        %v827 = vlaneseq
        %v828 = vshrl.u32 %v827, 7
        %v829 = vsub.s32 3, %v828
        %v830 = vrot.slane %v673, %v829
        %v831 = vmul.f32 %v821, %v826
        %v832 = vmul.f32 %v822, %v830
        %v833 = vadd.f32 %v798, %v831
        %v834 = vadd.f32 %v799, %v832
        %835 = vrot.lane.b32.xlu0 %v539, 127
        %v836 = vpop.permute.xlu0 %835
        %837 = vrot.lane.b32.xlu0 %v540, 127
        %v838 = vpop.permute.xlu0 %837
        %vm839 = vcmp.lt.s32.totalorder %v387, 127
        %v840 = vsel %vm839, %v836, %v838
        %v841 = vsel %vm839, %v838, %v836
        %vm842 = vmand %vm811, %vm774
        %vm843 = vmand %vm812, %vm775
        %vm844 = vmand %vm842, %vm778
        %vm845 = vmand %vm843, %vm779
        %v846 = vsel %vm844, 1, 0
        %v847 = vsel %vm845, 1, 0
        %vm848 = vcmp.eq.s32.totalorder %v846, 1
        %vm849 = vcmp.eq.s32.totalorder %v847, 1
        %v850 = vsel %vm848, %v840, 0.0
        %v851 = vsel %vm849, %v841, 0.0
        %v852 = vlaneseq
        %v853 = vshrl.u32 %v852, 7
        %v854 = vsub.s32 5, %v853
        %v855 = vrot.slane %v671, %v854
        %v856 = vlaneseq
        %v857 = vshrl.u32 %v856, 7
        %v858 = vsub.s32 5, %v857
        %v859 = vrot.slane %v673, %v858
        %v860 = vmul.f32 %v850, %v855
        %v861 = vmul.f32 %v851, %v859
        %v862 = vadd.f32 %v833, %v860
        %v863 = vadd.f32 %v834, %v861
        %864 = vrot.lane.b32.xlu0 %v539, 113
        %v865 = vpop.permute.xlu0 %864
        %866 = vrot.lane.b32.xlu0 %v540, 113
        %v867 = vpop.permute.xlu0 %866
        %vm868 = vcmp.lt.s32.totalorder %v387, 113
        %v869 = vsel %vm868, %v865, %v867
        %v870 = vsel %vm868, %v867, %v865
        %v871 = vadd.s32 %v389, 1
        %v872 = vadd.s32 %v390, 1
        %vm873 = vcmp.ge.s32.totalorder %v871, 0
        %vm874 = vcmp.ge.s32.totalorder %v872, 0
        %vm875 = vcmp.lt.s32.totalorder %v871, 16
        %vm876 = vcmp.lt.s32.totalorder %v872, 16
        %vm877 = vmand %vm873, %vm875
        %vm878 = vmand %vm874, %vm876
        %vm879 = vmand %vm877, %vm706
        %vm880 = vmand %vm878, %vm707
        %vm881 = vmand %vm879, %vm710
        %vm882 = vmand %vm880, %vm711
        %v883 = vsel %vm881, 1, 0
        %v884 = vsel %vm882, 1, 0
        %vm885 = vcmp.eq.s32.totalorder %v883, 1
        %vm886 = vcmp.eq.s32.totalorder %v884, 1
        %v887 = vsel %vm885, %v869, 0.0
        %v888 = vsel %vm886, %v870, 0.0
        %v889 = vlaneseq
        %v890 = vshrl.u32 %v889, 7
        %v891 = vsub.s32 6, %v890
        %v892 = vrot.slane %v671, %v891
        %v893 = vlaneseq
        %v894 = vshrl.u32 %v893, 7
        %v895 = vsub.s32 6, %v894
        %v896 = vrot.slane %v673, %v895
        %v897 = vmul.f32 %v887, %v892
        %v898 = vmul.f32 %v888, %v896
        %v899 = vadd.f32 %v862, %v897
        %v900 = vadd.f32 %v863, %v898
        %901 = vrot.lane.b32.xlu0 %v539, 112
        %v902 = vpop.permute.xlu0 %901
        %903 = vrot.lane.b32.xlu0 %v540, 112
        %v904 = vpop.permute.xlu0 %903
        %vm905 = vcmp.lt.s32.totalorder %v387, 112
        %v906 = vsel %vm905, %v902, %v904
        %v907 = vsel %vm905, %v904, %v902
        %vm908 = vmand %vm877, %vm739
        %vm909 = vmand %vm878, %vm740
        %vm910 = vmand %vm908, %vm743
        %vm911 = vmand %vm909, %vm744
        %v912 = vsel %vm910, 1, 0
        %v913 = vsel %vm911, 1, 0
        %vm914 = vcmp.eq.s32.totalorder %v912, 1
        %vm915 = vcmp.eq.s32.totalorder %v913, 1
        %v916 = vsel %vm914, %v906, 0.0
        %v917 = vsel %vm915, %v907, 0.0
        %v918 = vlaneseq
        %v919 = vshrl.u32 %v918, 7
        %v920 = vsub.s32 7, %v919
        %v921 = vrot.slane %v671, %v920
        %v922 = vlaneseq
        %v923 = vshrl.u32 %v922, 7
        %v924 = vsub.s32 7, %v923
        %v925 = vrot.slane %v673, %v924
        %v926 = vmul.f32 %v916, %v921
        %v927 = vmul.f32 %v917, %v925
        %v928 = vadd.f32 %v899, %v926
        %v929 = vadd.f32 %v900, %v927
        %930 = vrot.lane.b32.xlu0 %v539, 111
        %v931 = vpop.permute.xlu0 %930
        %932 = vrot.lane.b32.xlu0 %v540, 111
        %v933 = vpop.permute.xlu0 %932
        %vm934 = vcmp.lt.s32.totalorder %v387, 111
        %v935 = vsel %vm934, %v931, %v933
        %v936 = vsel %vm934, %v933, %v931
        %vm937 = vmand %vm877, %vm774
        %vm938 = vmand %vm878, %vm775
        %vm939 = vmand %vm937, %vm778
        %vm940 = vmand %vm938, %vm779
        %v941 = vsel %vm939, 1, 0
        %v942 = vsel %vm940, 1, 0
        %vm943 = vcmp.eq.s32.totalorder %v941, 1
        %vm944 = vcmp.eq.s32.totalorder %v942, 1
        %v945 = vsel %vm943, %v935, 0.0
        %v946 = vsel %vm944, %v936, 0.0
        %v947 = vlaneseq
        %v948 = vshrl.u32 %v947, 7
        %v949 = vsub.s32 0, %v948
        %v950 = vrot.slane %v675, %v949
        %v951 = vlaneseq
        %v952 = vshrl.u32 %v951, 7
        %v953 = vsub.s32 0, %v952
        %v954 = vrot.slane %v677, %v953
        %v955 = vmul.f32 %v945, %v950
        %v956 = vmul.f32 %v946, %v954
        %v957 = vadd.f32 %v928, %v955
        %v958 = vadd.f32 %v929, %v956
        %960 = vset.pattern.permute.xlu0 0
        %961 = vperm.xlu0 %960, %v409
        %v962 = vpop.permute.xlu0 %961
        %v964 = vmul.f32 %v957, %v962
        %v965 = vmul.f32 %v958, %v962
        %967 = vset.pattern.permute.xlu0 0
        %968 = vperm.xlu0 %967, %v410
        %v969 = vpop.permute.xlu0 %968
        %v971 = vadd.f32 %v964, %v969
        %v972 = vadd.f32 %v965, %v969
        %v973 = vmax.f32 %v971, 0.0
        %v974 = vmax.f32 %v972, 0.0
        %v975 = vpack.c.bf16 %v973, %v973
        %v976 = vpack.c.bf16 %v974, %v974
        %978 = vset.pattern.permute.xlu0 0
        %979 = vperm.xlu0 %978, %v415
        %v980 = vpop.permute.xlu0 %979
        %983 = vset.pattern.permute.xlu0 0
        %984 = vperm.xlu0 %983, %v416
        %v985 = vpop.permute.xlu0 %984
        %988 = vset.pattern.permute.xlu0 0
        %989 = vperm.xlu0 %988, %v417
        %v990 = vpop.permute.xlu0 %989
        %993 = vset.pattern.permute.xlu0 0
        %994 = vperm.xlu0 %993, %v418
        %v995 = vpop.permute.xlu0 %994
        %v1001 = vunpack.c.l.b16 %v411
        %v1002 = vunpack.c.l.b16 %v412
        %v1003 = vunpack.c.l.b16 %v413
        %v1004 = vunpack.c.l.b16 %v414
        %v1005 = vpack.c.b16 %v1002, %v1001
        %v1006 = vpack.c.b16 %v1004, %v1003
        %v1008 = vsel %vm461, %v1005, 0
        %v1011 = vsel %vm461, %v1006, 0
        %v1014 = vsel %vm471, %v975, 0
        %v1017 = vsel %vm471, %v976, 0
        %1019 = vmatprep.subr.bf16.mxu0 0
        %1020 = vmatpush1.bf16.msra.mxu0 0
        %1021 = vmatprep.subr.bf16.mxu0 0
        %1022 = vmatpush1.bf16.msra.mxu0 0
        %1023 = vmatprep.subr.bf16.mxu0 0
        %1024 = vmatpush1.bf16.msra.mxu0 0
        %1025 = vmatprep.subr.bf16.mxu0 0
        %1026 = vmatpush1.bf16.msra.mxu0 0
        %1027 = vmatprep.subr.bf16.mxu0 0
        %1028 = vmatpush1.bf16.msra.mxu0 0
        %1029 = vmatprep.subr.bf16.mxu0 0
        %1030 = vmatpush1.bf16.msra.mxu0 0
        %1031 = vmatprep.subr.bf16.mxu0 0
        %1032 = vmatpush1.bf16.msra.mxu0 0
        %1033 = vmatprep.subr.bf16.mxu0 %v1017
        %1034 = vmatpush1.bf16.msra.mxu0 %v1014
        %1035 = vmatprep.subr.bf16.mxu0 0
        %1036 = vmatpush2.bf16.msra.mxu0 0
        %1037 = vmatprep.subr.bf16.mxu0 0
        %1038 = vmatpush2.bf16.msra.mxu0 0
        %1039 = vmatprep.subr.bf16.mxu0 0
        %1040 = vmatpush2.bf16.msra.mxu0 0
        %1041 = vmatprep.subr.bf16.mxu0 0
        %1042 = vmatpush2.bf16.msra.mxu0 0
        %1043 = vmatprep.subr.bf16.mxu0 0
        %1044 = vmatpush2.bf16.msra.mxu0 0
        %1045 = vmatprep.subr.bf16.mxu0 0
        %1046 = vmatpush2.bf16.msra.mxu0 0
        %1047 = vmatprep.subr.bf16.mxu0 0
        %1048 = vmatpush2.bf16.msra.mxu0 0
        %1049 = vmatprep.subr.bf16.mxu0 0
        %1050 = vmatpush2.bf16.msra.mxu0 0
        %1051 = vmatprep.mubr.bf16.mxu0 0
        %1052 = vmatmul.mubr.bf16.gmra.mxu0 %v1008
        %v1053 = vpop.f32.mrf.mxu0
        %v1054 = vadd.f32 %v980, %v1053
        %v1055 = vpop.f32.mrf.mxu0
        %v1056 = vadd.f32 %v980, %v1055
        %v1057 = vpop.f32.mrf.mxu0
        %v1058 = vadd.f32 %v985, %v1057
        %v1059 = vpop.f32.mrf.mxu0
        %v1060 = vadd.f32 %v985, %v1059
        %1061 = vmatprep.mubr.bf16.mxu0 0
        %1062 = vmatmul.mubr.bf16.gmra.mxu0 %v1011
        %v1063 = vpop.f32.mrf.mxu0
        %v1064 = vadd.f32 %v990, %v1063
        %v1065 = vpop.f32.mrf.mxu0
        %v1066 = vadd.f32 %v990, %v1065
        %v1067 = vpop.f32.mrf.mxu0
        %v1068 = vadd.f32 %v995, %v1067
        %v1069 = vpop.f32.mrf.mxu0
        %v1070 = vadd.f32 %v995, %v1069
        %1071 = vdwg.mxu0
        %v1072 = vadd.f32 %v1054, %v541
        %v1073 = vadd.f32 %v1056, %v542
        %v1074 = vadd.f32 %v1058, %v543
        %v1075 = vadd.f32 %v1060, %v544
        %v1076 = vadd.f32 %v1064, %v545
        %v1077 = vadd.f32 %v1066, %v546
        %v1078 = vadd.f32 %v1068, %v547
        %v1079 = vadd.f32 %v1070, %v548
        %v1080 = vmax.f32 %v1072, 0.0
        %v1081 = vmax.f32 %v1073, 0.0
        %v1082 = vmax.f32 %v1074, 0.0
        %v1083 = vmax.f32 %v1075, 0.0
        %v1084 = vmax.f32 %v1076, 0.0
        %v1085 = vmax.f32 %v1077, 0.0
        %v1086 = vmax.f32 %v1078, 0.0
        %v1087 = vmax.f32 %v1079, 0.0
        %1088 = vst [vmem:[%s379] sm:$0xff] %v1080
        %1089 = vst [vmem:[%s379 + $0x8] sm:$0xff] %v1081
        %1090 = vst [vmem:[%s379 + $0x10] sm:$0xff] %v1082
        %1091 = vst [vmem:[%s379 + $0x18] sm:$0xff] %v1083
        %1092 = vst [vmem:[%s379 + $0x20] sm:$0xff] %v1084
        %1093 = vst [vmem:[%s379 + $0x28] sm:$0xff] %v1085
        %1094 = vst [vmem:[%s379 + $0x30] sm:$0xff] %v1086
        %1095 = vst [vmem:[%s379 + $0x38] sm:$0xff] %v1087
        %s1096 = sand.u32 %s269, 1
        %s1097 = scalar_lea.sflag [#allocation3], %s1096
        %s1098 = sand.u32 %s269, 1
        %s1099 = smul.addr %s1098, 64
        %s1100 = scalar_lea.vmem [#allocation2], %s1099
        // Predicated region
        $region65: #{tpu_custom_call.1} parent=63 // pred_check
          %p1101 = pneg %p279
        $region66: #{tpu_custom_call.1} parent=63 // pred_check_branch
          %1103 = sbr.rel (%p1101) target = $region68
        $region67: #{tpu_custom_call.1} parent=63 // pred_region
          %s1105 = ssub.s32 1024, 1024
          %1106 = vsyncadd %s1097, %s1105
          %s1107 = smul.addr %s25, 8
          %s1108 = smul.addr %s1107, 128
          %s1109 = scalar_lea.hbm %s11, %s1108
          %s1110 = sshll.u32 %s1100, 4
          %s1111 = int_to_ptr.vmem [resolvable:$true] %s1110
          %1116 = dma.vmem_to_hbm [thread:$0]  %s1111, 1024, %s1109, %s1097, 256, 256, 16
        $region68: #{tpu_custom_call.1} parent=63 // pred_fallthru
          _
      $region64: #{tpu_custom_call.1} parent=5 // pred_fallthru
        _
      %p1117 = scmp.le.s32.totalorder 2, %s20
      // Predicated region
      $region69: #{tpu_custom_call.1} parent=5 // pred_check
        %p1118 = pneg %p1117
      $region70: #{tpu_custom_call.1} parent=5 // pred_check_branch
        %1120 = sbr.rel (%p1118) target = $region72
      $region71: #{tpu_custom_call.1} parent=5 // pred_region
        %s1121 = ssub.s32 %s20, 2
        // Predicated region
        $region73: #{tpu_custom_call.1} parent=71 // pred_check
          %p1122 = pneg %p285
        $region74: #{tpu_custom_call.1} parent=71 // pred_check_branch
          %1124 = sbr.rel (%p1122) target = $region76
        $region75: #{tpu_custom_call.1} parent=71 // pred_region
          %s1125 = sand.u32 %s270, 1
          %s1126 = scalar_lea.sflag [#allocation3], %s1125
          %s1127 = sand.u32 %s270, 1
          %s1128 = smul.addr %s1127, 64
          %s1129 = scalar_lea.vmem [#allocation2], %s1128
          %1130 = dma.done %s1126, 1024
        $region76: #{tpu_custom_call.1} parent=71 // pred_fallthru
          _
      $region72: #{tpu_custom_call.1} parent=5 // pred_fallthru
        _
    $region6: #{tpu_custom_call.1} parent=1 // loop_footer
      %s24 = sadd.s32 1, %s20
    $region7: #{tpu_custom_call.1} parent=1 // loop_footer_branch
      %19 = sbr.rel target = $region3
    $region8: #{tpu_custom_call.1} parent=1 // loop_exit
      _
    %1131 = vsyncpa [#allocation3], 1
    %s1132 = scalar_lea.sflag [#allocation3], 1
    %1133 = vsyncpa %s1132, 1

</llo_original>
